<compile_context>
chip_gen: v7x
topology: tpu7x:2x2x1
jax: 0.10.0
libtpu: 0.0.40
codegen_flags: <defaults>
</compile_context>

<pallas_src>
from functools import partial

import jax
import jax.numpy as jnp
from jax import lax
from jax.experimental import pallas as pl
from jax.experimental.pallas import tpu as pltpu


# --------------------------------------------------------------------------------------
# Pallas kernels
# --------------------------------------------------------------------------------------
def _bilstm_layer_kernel(*refs, num_src, tt, batch, hidden):
    """One grid step = one time chunk of a bidirectional LSTM layer (BOTH directions).

    Grid: (chunk index ci,).  Forward works on chunk ci, backward on chunk nchunks-1-ci;
    inside the chunk the backward direction walks its timesteps in reverse.  h/c for both
    directions are carried across chunks in VMEM scratch.

    refs (in order):
      xf_refs[num_src] : (tt*B, D)   forward-chunk input tile per source slab (bf16)
      xb_refs[num_src] : (tt*B, D)   backward-chunk input tile per source slab (bf16)
      wih_refs[num_src]: (2, D, 4H)  per-source input weights, dim0 = direction (bf16)
      whh_ref          : (2, H, 4H)  recurrent weights per direction (bf16)
      b_ref            : (2, 1, 4H)  summed bias (b_ih + b_hh) per direction (f32)
      outf_ref         : (tt, B, H)  forward hidden states for chunk ci (bf16)
      outb_ref         : (tt, B, H)  backward hidden states for chunk nchunks-1-ci (bf16)
      gif_ref, gib_ref : (tt*B, 4H)  VMEM scratch: precomputed input-gate pre-activations
      h_scr, c_scr     : (2, B, H)   VMEM scratch: per-direction state carried across chunks
    Gate column order is (i, f, o, g).
    """
    S, B, H = num_src, batch, hidden
    xf_refs = refs[:S]
    xb_refs = refs[S:2 * S]
    wih_refs = refs[2 * S:3 * S]
    (whh_ref, b_ref, outf_ref, outb_ref,
     gif_ref, gib_ref, h_scr, c_scr) = refs[3 * S:]

    ci = pl.program_id(0)

    @pl.when(ci == 0)
    def _():                         # reset carried state at the start of the sequence
        h_scr[...] = jnp.zeros_like(h_scr)
        c_scr[...] = jnp.zeros_like(c_scr)

    # ---- loop-invariant loads (hoisted) ----------------------------------------------
    whh_f = whh_ref[0]               # (H, 4H) bf16
    whh_b = whh_ref[1]
    bias = b_ref[...]                # (2, 1, 4H) f32

    # ---- phase 1: whole-chunk input projection, ONE GEMM per (direction, source) -----
    gf = jnp.dot(xf_refs[0][...], wih_refs[0][0], preferred_element_type=jnp.float32)
    gb = jnp.dot(xb_refs[0][...], wih_refs[0][1], preferred_element_type=jnp.float32)
    for s in range(1, S):
        gf = gf + jnp.dot(xf_refs[s][...], wih_refs[s][0],
                          preferred_element_type=jnp.float32)
        gb = gb + jnp.dot(xb_refs[s][...], wih_refs[s][1],
                          preferred_element_type=jnp.float32)
    gif_ref[...] = gf + bias[0]                         # (tt*B, 4H) f32
    gib_ref[...] = gb + bias[1]

    # ---- phase 2: serial recurrence, both directions interleaved per step ------------
    def gate_update(gates, c):
        sig = jax.nn.sigmoid(gates[:, :3 * H])          # (i, f, o) in one contiguous pass
        g = jnp.tanh(gates[:, 3 * H:])                  # cell candidate
        c = sig[:, H:2 * H] * c + sig[:, :H] * g
        h = sig[:, 2 * H:3 * H] * jnp.tanh(c)
        return h, c

    def step(s, carry):
        hf, cf, hb, cb = carry                          # (B, H) f32 each
        tf = s                                          # forward local time in chunk
        tb = tt - 1 - s                                 # backward local time in chunk

        gates_f = gif_ref[pl.ds(tf * B, B)] + jnp.dot(
            hf.astype(whh_f.dtype), whh_f, preferred_element_type=jnp.float32)
        gates_b = gib_ref[pl.ds(tb * B, B)] + jnp.dot(
            hb.astype(whh_b.dtype), whh_b, preferred_element_type=jnp.float32)

        hf, cf = gate_update(gates_f, cf)
        hb, cb = gate_update(gates_b, cb)

        outf_ref[tf] = hf.astype(outf_ref.dtype)
        outb_ref[tb] = hb.astype(outb_ref.dtype)
        return hf, cf, hb, cb

    init = (h_scr[0], c_scr[0], h_scr[1], c_scr[1])
    hf, cf, hb, cb = lax.fori_loop(0, tt, step, init, unroll=min(tt, 8))
    h_scr[0] = hf
    c_scr[0] = cf
    h_scr[1] = hb
    c_scr[1] = cb


def _decoder_softmax_kernel(x_ref, w_ref, b_ref, o_ref):
    """Linear (4H -> output_dim) fused with softmax over dim=1 (rows)."""
    logits = (jnp.dot(x_ref[...], w_ref[...], preferred_element_type=jnp.float32)
              + b_ref[...])                             # (B, O)
    m = jnp.max(logits, axis=1, keepdims=True)
    e = jnp.exp(logits - m)
    o_ref[...] = e / jnp.sum(e, axis=1, keepdims=True)


# --------------------------------------------------------------------------------------
# VMEM budgeting / chunking helpers
# --------------------------------------------------------------------------------------
def _vmem_capacity_bytes():
    try:
        info = pltpu.get_tpu_info()
        for name in ("vmem_capacity_bytes", "vmem_size_bytes", "vmem_bytes"):
            v = getattr(info, name, None)
            if v:
                return int(v)
    except Exception:
        pass
    return 64 << 20                                  # conservative: assume v7x-sized VMEM


def _vmem_budgets():
    cap = _vmem_capacity_bytes()
    if cap >= (100 << 20):                           # v5e / v6e: 128 MiB VMEM
        return 64 << 20, 96 << 20                    # (chunk budget, vmem_limit_bytes)
    return 20 << 20, 48 << 20                        # v7x: 64 MiB VMEM


def _round_up(x, m):
    return -(-x // m) * m


def _tile_bytes(rows, cols, itemsize):
    """VMEM footprint of a (rows, cols) tile after (8,128) padding."""
    return _round_up(max(rows, 1), 8) * _round_up(max(cols, 1), 128) * itemsize


def _pick_time_chunk(T, B, d_in, num_src, hidden, budget_bytes):
    """Largest divisor of T whose padded per-grid-step VMEM footprint fits the budget.
    tt must also satisfy the (8,128) block constraint on the flattened (tt*B, D) tiles."""
    G = 4 * hidden

    def vmem_est(tt):
        rows = tt * B
        x_tiles = 2 * num_src * 2 * _tile_bytes(rows, d_in, 2)     # fwd+bwd views, dbl-buffered, bf16
        out_tiles = 2 * 2 * tt * _tile_bytes(B, hidden, 2)         # (tt,B,H) tiles pad per-timestep
        gi = 2 * _tile_bytes(rows, G, 4)                           # f32 gate scratch
        w = 2 * (num_src * 2 * _tile_bytes(d_in, G, 2)
                 + 2 * _tile_bytes(hidden, G, 2)
                 + 2 * _tile_bytes(1, G, 4))
        state = 4 * _tile_bytes(B, hidden, 4)
        return x_tiles + out_tiles + gi + w + state

    cands = [tt for tt in range(1, T + 1)
             if T % tt == 0 and (tt == T or (tt * B) % 8 == 0)]
    fitting = [tt for tt in cands if vmem_est(tt) <= budget_bytes]
    return max(fitting) if fitting else min(cands)


# --------------------------------------------------------------------------------------
# Wrappers calling pallas_call
# --------------------------------------------------------------------------------------
def bilstm_layer(xs, w_ih_srcs, w_hh, b, *, hidden, batch, seq):
    """One bidirectional LSTM layer as a single pallas_call.

    xs       : list of S source arrays, each (T*B, D_s) bf16, time-major flattened
               (row index = t*B + b).  Layer 0: S=1 embedding slab; deeper layers: S=2
               = previous layer's forward / backward slabs (W_ih is split per source,
               so no HBM concat is ever needed).
    w_ih_srcs: list of S arrays (2, D_s, 4H) bf16 (dim0 = direction)
    w_hh     : (2, H, 4H) bf16
    b        : (2, 1, 4H) f32 (b_ih + b_hh, gate order i,f,o,g)
    returns  : (out_f, out_b), each (T, B, H) bf16, time-aligned like PyTorch.
    """
    S = len(xs)
    T, B, H = seq, batch, hidden
    D = xs[0].shape[1]
    budget, vmem_limit = _vmem_budgets()
    tt = _pick_time_chunk(T, B, D, S, H, budget)
    nchunks = T // tt
    rows = tt * B

    xf_specs = [pl.BlockSpec((rows, xs[s].shape[1]), lambda ci: (ci, 0))
                for s in range(S)]
    xb_specs = [pl.BlockSpec((rows, xs[s].shape[1]), lambda ci: (nchunks - 1 - ci, 0))
                for s in range(S)]
    wih_specs = [pl.BlockSpec(w.shape, lambda ci: (0, 0, 0)) for w in w_ih_srcs]
    whh_spec = pl.BlockSpec(w_hh.shape, lambda ci: (0, 0, 0))
    b_spec = pl.BlockSpec(b.shape, lambda ci: (0, 0, 0))
    outf_spec = pl.BlockSpec((tt, B, H), lambda ci: (ci, 0, 0))
    outb_spec = pl.BlockSpec((tt, B, H), lambda ci: (nchunks - 1 - ci, 0, 0))

    kernel = partial(_bilstm_layer_kernel, num_src=S, tt=tt, batch=B, hidden=H)

    flops = int(4 * T * B * 4 * H * (S * D + H))                 # both dirs, MAC = 2 flops
    transcendentals = int(2 * T * B * 5 * H)                     # sigmoid(3H) + 2*tanh(H)
    bytes_accessed = int(2 * (2 * S * T * B * D + 2 * T * B * H)
                         + nchunks * 2 * (S * 2 * D * 4 * H + 2 * H * 4 * H)
                         + nchunks * 4 * 2 * 4 * H)

    out_f, out_b = pl.pallas_call(
        kernel,
        out_shape=(jax.ShapeDtypeStruct((T, B, H), jnp.bfloat16),
                   jax.ShapeDtypeStruct((T, B, H), jnp.bfloat16)),
        grid=(nchunks,),
        in_specs=xf_specs + xb_specs + wih_specs + [whh_spec, b_spec],
        out_specs=(outf_spec, outb_spec),
        scratch_shapes=[
            pltpu.VMEM((rows, 4 * H), jnp.float32),   # forward-chunk input gates
            pltpu.VMEM((rows, 4 * H), jnp.float32),   # backward-chunk input gates
            pltpu.VMEM((2, B, H), jnp.float32),       # h carried across chunks (fwd, bwd)
            pltpu.VMEM((2, B, H), jnp.float32),       # c carried across chunks (fwd, bwd)
        ],
        compiler_params=pltpu.CompilerParams(
            dimension_semantics=("arbitrary",),       # state carried across the chunk axis
            vmem_limit_bytes=vmem_limit,
        ),
        cost_estimate=pl.CostEstimate(flops=flops, transcendentals=transcendentals,
                                      bytes_accessed=bytes_accessed),
    )(*xs, *xs, *w_ih_srcs, w_hh, b)
    return out_f, out_b


def decoder_softmax(x, w, b, output_dim):
    """x: (B, 4H) f32 -> softmax(x @ w + b) over rows, shape (B, output_dim).
    Tiny fused Linear+Softmax launch (could equally be left to plain XLA)."""
    B = x.shape[0]
    return pl.pallas_call(
        _decoder_softmax_kernel,
        out_shape=jax.ShapeDtypeStruct((B, output_dim), jnp.float32),
        in_specs=[pl.BlockSpec(memory_space=pltpu.MemorySpace.VMEM)] * 3,
        out_specs=pl.BlockSpec(memory_space=pltpu.MemorySpace.VMEM),
    )(x, w, b)


def birnn_forward(tokens, params, config):
    """tokens: (B, T) int32 token ids.  Returns (B, output_dim) softmax probabilities."""
    B, T = tokens.shape
    H = config["hidden_dim"]

    # Embedding gather, emitted directly time-major flattened (row = t*B + b); activations
    # stream through the LSTM stack in bf16 (matmul operands), state/gate math stays f32.
    emb = jnp.take(params["embedding"], tokens.T.reshape(-1), axis=0)     # (T*B, E) f32
    xs = [emb.astype(jnp.bfloat16)]                                       # single source slab

    out_f = out_b = None
    for lp in params["lstm"]:
        out_f, out_b = bilstm_layer(xs, lp["w_ih"], lp["w_hh"], lp["b"],
                                    hidden=H, batch=B, seq=T)
        # (T,B,H) -> (T*B,H) is a free row-major view; the next layer consumes the two
        # direction slabs as separate sources (its W_ih is split per source).
        xs = [out_f.reshape(T * B, H), out_b.reshape(T * B, H)]

    # out[:, 0, :]  == [h_fwd(t=0)   | h_bwd(t=0)]
    # out[:, -1, :] == [h_fwd(t=T-1) | h_bwd(t=T-1)]   (time-aligned, as in PyTorch)
    first = jnp.concatenate([out_f[0], out_b[0]], axis=-1)
    last = jnp.concatenate([out_f[T - 1], out_b[T - 1]], axis=-1)
    cat = jnp.concatenate([first, last], axis=-1).astype(jnp.float32)     # (B, 4H)

    return decoder_softmax(cat, params["dec_w"], params["dec_b"], config["output_dim"])


# --------------------------------------------------------------------------------------
# Deterministic parameter init (matches BiRNN.init_weights semantics)
# --------------------------------------------------------------------------------------
def _xavier_uniform(key, pt_shape):
    """PyTorch xavier_uniform_ on a weight of shape (fan_out, fan_in)."""
    fan_out, fan_in = pt_shape
    bound = (6.0 / (fan_in + fan_out)) ** 0.5
    return jax.random.uniform(key, pt_shape, jnp.float32, -bound, bound)


def _gate_reorder(w, H):
    """PyTorch gate block order (i, f, g, o) -> kernel order (i, f, o, g) along axis 0."""
    return jnp.concatenate([w[:H], w[H:2 * H], w[3 * H:], w[2 * H:3 * H]], axis=0)


def init_params(key, config):
    V, E, H, L, O = (config["vocab_size"], config["embedding_dim"],
                     config["hidden_dim"], config["num_layers"], config["output_dim"])
    keys = iter(jax.random.split(key, 2 + 4 * L))

    # nn.Embedding default init: N(0, 1) (init_weights does not touch it).
    params = {"embedding": jax.random.normal(next(keys), (V, E), jnp.float32)}

    lstm = []
    for layer in range(L):
        d_in = E if layer == 0 else 2 * H
        n_src = 1 if layer == 0 else 2            # deeper layers consume [fwd | bwd] slabs
        d_src = d_in // n_src

        wih_dir, whh_dir, b_dir = [], [], []
        for _ in range(2):                        # forward / reverse directions
            w_ih_pt = _xavier_uniform(next(keys), (4 * H, d_in))   # PyTorch layout, (i,f,g,o)
            w_hh_pt = _xavier_uniform(next(keys), (4 * H, H))
            b_ih = jnp.zeros((4 * H,), jnp.float32)                # nn.init.zeros_
            b_hh = jnp.zeros((4 * H,), jnp.float32)
            wih_dir.append(_gate_reorder(w_ih_pt, H).T)            # (d_in, 4H), cols (i,f,o,g)
            whh_dir.append(_gate_reorder(w_hh_pt, H).T)            # (H, 4H)
            b_dir.append(_gate_reorder(b_ih + b_hh, H))            # explicit b_ih + b_hh sum
        # split input weights into per-source halves (source 0 = fwd slab, 1 = bwd slab)
        w_ih = [jnp.stack([wih_dir[0][s * d_src:(s + 1) * d_src],
                           wih_dir[1][s * d_src:(s + 1) * d_src]]).astype(jnp.bfloat16)
                for s in range(n_src)]                             # (2, d_src, 4H) bf16
        lstm.append({"w_ih": w_ih,
                     "w_hh": jnp.stack(whh_dir).astype(jnp.bfloat16),   # (2, H, 4H) bf16
                     "b": jnp.stack(b_dir)[:, None, :]})                # (2, 1, 4H) f32
    params["lstm"] = lstm

    params["dec_w"] = _xavier_uniform(next(keys), (O, 4 * H)).T    # kernel layout (4H, O)
    params["dec_b"] = jnp.zeros((1, O), jnp.float32)
    return params


# --------------------------------------------------------------------------------------
if __name__ == "__main__":
    config = dict(vocab_size=50, embedding_dim=32, hidden_dim=32,
                  num_layers=2, output_dim=2)
    B, T = 2, 8   # TODO(synk): B=2 is latency-bound on the recurrence; batch more
                  # sequences per call (B>=8) for real workloads.

    root = jax.random.PRNGKey(0)
    k_params, k_tokens = jax.random.split(root)
    params = init_params(k_params, config)
    tokens = jax.random.randint(k_tokens, (B, T), 0, config["vocab_size"], dtype=jnp.int32)

    probs = birnn_forward(tokens, params, config)
    probs = jax.block_until_ready(probs)

    assert probs.shape == (B, config["output_dim"])
    assert bool(jnp.all(jnp.isfinite(probs)))
    # Softmax rows must sum to 1.
    assert bool(jnp.all(jnp.abs(jnp.sum(probs, axis=1) - 1.0) < 1e-5))
    print("KERNEL_OK")
</pallas_src>

<mosaic_0001>
module attributes {stable_mosaic.version = 11 : i64} {
  func.func @_bilstm_layer_kernel(%arg0: i32, %arg1: memref<16x32xbf16, #tpu.memory_space<vmem>>, %arg2: memref<16x32xbf16, #tpu.memory_space<vmem>>, %arg3: memref<2x32x128xbf16, #tpu.memory_space<vmem>>, %arg4: memref<2x32x128xbf16, #tpu.memory_space<vmem>>, %arg5: memref<2x1x128xf32, #tpu.memory_space<vmem>>, %arg6: memref<8x2x32xbf16, #tpu.memory_space<vmem>>, %arg7: memref<8x2x32xbf16, #tpu.memory_space<vmem>>, %arg8: memref<16x128xf32, #tpu.memory_space<vmem>>, %arg9: memref<16x128xf32, #tpu.memory_space<vmem>>, %arg10: memref<2x2x32xf32, #tpu.memory_space<vmem>>, %arg11: memref<2x2x32xf32, #tpu.memory_space<vmem>>) attributes {dimension_semantics = [#tpu.dimension_semantics<arbitrary>], iteration_bounds = array<i64: 1>, scalar_prefetch = 0 : i64, scratch_operands = 4 : i64, tpu.core_type = #tpu.core_type<tc>, window_params = [{transform_indices = @transform_0, window_bounds = array<i64: 16, 32>}, {transform_indices = @transform_1, window_bounds = array<i64: 16, 32>}, {pipeline_mode = #tpu.pipeline_mode<synchronous>, transform_indices = @transform_2, window_bounds = array<i64: 2, 32, 128>}, {pipeline_mode = #tpu.pipeline_mode<synchronous>, transform_indices = @transform_3, window_bounds = array<i64: 2, 32, 128>}, {pipeline_mode = #tpu.pipeline_mode<synchronous>, transform_indices = @transform_4, window_bounds = array<i64: 2, 1, 128>}, {transform_indices = @transform_5, window_bounds = array<i64: 8, 2, 32>}, {transform_indices = @transform_6, window_bounds = array<i64: 8, 2, 32>}]} {
    %c0_i32 = arith.constant 0 : i32
    %0 = arith.cmpi eq, %arg0, %c0_i32 : i32
    %1 = arith.extui %0 : i1 to i32
    %c0_i32_0 = arith.constant 0 : i32
    %2 = arith.cmpi ne, %1, %c0_i32_0 : i32
    scf.if %2 {
      %cst_152 = arith.constant 0.000000e+00 : f32
      %486 = vector.broadcast %cst_152 : f32 to vector<2x2x32xf32>
      %c0_153 = arith.constant 0 : index
      %c0_154 = arith.constant 0 : index
      %c0_155 = arith.constant 0 : index
      %487 = vector.load %arg10[%c0_153, %c0_154, %c0_155] : memref<2x2x32xf32, #tpu.memory_space<vmem>>, vector<2x2x32xf32>
      tpu.vector_store %arg10[%c0_153, %c0_154, %c0_155], %486 {strides = array<i32>} : memref<2x2x32xf32, #tpu.memory_space<vmem>>, vector<2x2x32xf32>,
      %cst_156 = arith.constant 0.000000e+00 : f32
      %488 = vector.broadcast %cst_156 : f32 to vector<2x2x32xf32>
      %c0_157 = arith.constant 0 : index
      %c0_158 = arith.constant 0 : index
      %c0_159 = arith.constant 0 : index
      %489 = vector.load %arg11[%c0_157, %c0_158, %c0_159] : memref<2x2x32xf32, #tpu.memory_space<vmem>>, vector<2x2x32xf32>
      tpu.vector_store %arg11[%c0_157, %c0_158, %c0_159], %488 {strides = array<i32>} : memref<2x2x32xf32, #tpu.memory_space<vmem>>, vector<2x2x32xf32>,
    } else {
    }
    %c0 = arith.constant 0 : index
    %c0_1 = arith.constant 0 : index
    %c0_2 = arith.constant 0 : index
    %3 = vector.load %arg4[%c0, %c0_1, %c0_2] : memref<2x32x128xbf16, #tpu.memory_space<vmem>>, vector<1x32x128xbf16>
    %4 = vector.shape_cast %3 : vector<1x32x128xbf16> to vector<32x128xbf16>
    %c1 = arith.constant 1 : index
    %c0_3 = arith.constant 0 : index
    %c0_4 = arith.constant 0 : index
    %5 = vector.load %arg4[%c1, %c0_3, %c0_4] : memref<2x32x128xbf16, #tpu.memory_space<vmem>>, vector<1x32x128xbf16>
    %6 = vector.shape_cast %5 : vector<1x32x128xbf16> to vector<32x128xbf16>
    %c0_5 = arith.constant 0 : index
    %c0_6 = arith.constant 0 : index
    %c0_7 = arith.constant 0 : index
    %7 = vector.load %arg5[%c0_5, %c0_6, %c0_7] : memref<2x1x128xf32, #tpu.memory_space<vmem>>, vector<2x1x128xf32>
    %c0_8 = arith.constant 0 : index
    %c0_9 = arith.constant 0 : index
    %8 = vector.load %arg1[%c0_8, %c0_9] : memref<16x32xbf16, #tpu.memory_space<vmem>>, vector<16x32xbf16>
    %c0_10 = arith.constant 0 : index
    %c0_11 = arith.constant 0 : index
    %c0_12 = arith.constant 0 : index
    %9 = vector.load %arg3[%c0_10, %c0_11, %c0_12] : memref<2x32x128xbf16, #tpu.memory_space<vmem>>, vector<1x32x128xbf16>
    %10 = vector.shape_cast %9 : vector<1x32x128xbf16> to vector<32x128xbf16>
    %cst = arith.constant dense<0.000000e+00> : vector<16x128xf32>
    %11 = tpu.matmul %8, %10, %cst {dimension_numbers = #tpu.dot_dimension_numbers<[1], [0], [0], [1], [0, 0, 1, 1], [], []>} : vector<16x32xbf16>, vector<32x128xbf16>, vector<16x128xf32> -> vector<16x128xf32>
    %c0_13 = arith.constant 0 : index
    %c0_14 = arith.constant 0 : index
    %12 = vector.load %arg2[%c0_13, %c0_14] : memref<16x32xbf16, #tpu.memory_space<vmem>>, vector<16x32xbf16>
    %c1_15 = arith.constant 1 : index
    %c0_16 = arith.constant 0 : index
    %c0_17 = arith.constant 0 : index
    %13 = vector.load %arg3[%c1_15, %c0_16, %c0_17] : memref<2x32x128xbf16, #tpu.memory_space<vmem>>, vector<1x32x128xbf16>
    %14 = vector.shape_cast %13 : vector<1x32x128xbf16> to vector<32x128xbf16>
    %cst_18 = arith.constant dense<0.000000e+00> : vector<16x128xf32>
    %15 = tpu.matmul %12, %14, %cst_18 {dimension_numbers = #tpu.dot_dimension_numbers<[1], [0], [0], [1], [0, 0, 1, 1], [], []>} : vector<16x32xbf16>, vector<32x128xbf16>, vector<16x128xf32> -> vector<16x128xf32>
    %16 = vector.extract_strided_slice %7 {offsets = [0, 0, 0], sizes = [1, 1, 128], strides = [1, 1, 1]} : vector<2x1x128xf32> to vector<1x1x128xf32>
    %17 = vector.shape_cast %16 : vector<1x1x128xf32> to vector<1x128xf32>
    %18 = vector.broadcast %17 : vector<1x128xf32> to vector<16x128xf32>
    %19 = arith.addf %11, %18 : vector<16x128xf32>
    %c0_19 = arith.constant 0 : index
    %c0_20 = arith.constant 0 : index
    %20 = vector.load %arg8[%c0_19, %c0_20] : memref<16x128xf32, #tpu.memory_space<vmem>>, vector<16x128xf32>
    tpu.vector_store %arg8[%c0_19, %c0_20], %19 {strides = array<i32>} : memref<16x128xf32, #tpu.memory_space<vmem>>, vector<16x128xf32>,
    %21 = vector.extract_strided_slice %7 {offsets = [1, 0, 0], sizes = [1, 1, 128], strides = [1, 1, 1]} : vector<2x1x128xf32> to vector<1x1x128xf32>
    %22 = vector.shape_cast %21 : vector<1x1x128xf32> to vector<1x128xf32>
    %23 = vector.broadcast %22 : vector<1x128xf32> to vector<16x128xf32>
    %24 = arith.addf %15, %23 : vector<16x128xf32>
    %c0_21 = arith.constant 0 : index
    %c0_22 = arith.constant 0 : index
    %25 = vector.load %arg9[%c0_21, %c0_22] : memref<16x128xf32, #tpu.memory_space<vmem>>, vector<16x128xf32>
    tpu.vector_store %arg9[%c0_21, %c0_22], %24 {strides = array<i32>} : memref<16x128xf32, #tpu.memory_space<vmem>>, vector<16x128xf32>,
    %c0_23 = arith.constant 0 : index
    %c0_24 = arith.constant 0 : index
    %c0_25 = arith.constant 0 : index
    %26 = vector.load %arg10[%c0_23, %c0_24, %c0_25] : memref<2x2x32xf32, #tpu.memory_space<vmem>>, vector<1x2x32xf32>
    %27 = vector.shape_cast %26 : vector<1x2x32xf32> to vector<2x32xf32>
    %c0_26 = arith.constant 0 : index
    %c0_27 = arith.constant 0 : index
    %c0_28 = arith.constant 0 : index
    %28 = vector.load %arg11[%c0_26, %c0_27, %c0_28] : memref<2x2x32xf32, #tpu.memory_space<vmem>>, vector<1x2x32xf32>
    %29 = vector.shape_cast %28 : vector<1x2x32xf32> to vector<2x32xf32>
    %c1_29 = arith.constant 1 : index
    %c0_30 = arith.constant 0 : index
    %c0_31 = arith.constant 0 : index
    %30 = vector.load %arg10[%c1_29, %c0_30, %c0_31] : memref<2x2x32xf32, #tpu.memory_space<vmem>>, vector<1x2x32xf32>
    %31 = vector.shape_cast %30 : vector<1x2x32xf32> to vector<2x32xf32>
    %c1_32 = arith.constant 1 : index
    %c0_33 = arith.constant 0 : index
    %c0_34 = arith.constant 0 : index
    %32 = vector.load %arg11[%c1_32, %c0_33, %c0_34] : memref<2x2x32xf32, #tpu.memory_space<vmem>>, vector<1x2x32xf32>
    %33 = vector.shape_cast %32 : vector<1x2x32xf32> to vector<2x32xf32>
    %c0_i32_35 = arith.constant 0 : i32
    %c7_i32 = arith.constant 7 : i32
    %34 = arith.subi %c7_i32, %c0_i32_35 : i32
    %c2_i32 = arith.constant 2 : i32
    %35 = arith.muli %c0_i32_35, %c2_i32 : i32
    %36 = arith.index_cast %35 : i32 to index
    %c0_36 = arith.constant 0 : index
    %37 = vector.load %arg8[%36, %c0_36] : memref<16x128xf32, #tpu.memory_space<vmem>>, vector<2x128xf32>
    %38 = arith.truncf %27 : vector<2x32xf32> to vector<2x32xbf16>
    %cst_37 = arith.constant dense<0.000000e+00> : vector<2x128xf32>
    %39 = tpu.matmul %38, %4, %cst_37 {dimension_numbers = #tpu.dot_dimension_numbers<[1], [0], [0], [1], [0, 0, 1, 1], [], []>} : vector<2x32xbf16>, vector<32x128xbf16>, vector<2x128xf32> -> vector<2x128xf32>
    %40 = arith.addf %37, %39 : vector<2x128xf32>
    %c2_i32_38 = arith.constant 2 : i32
    %41 = arith.muli %34, %c2_i32_38 : i32
    %42 = arith.index_cast %41 : i32 to index
    %c0_39 = arith.constant 0 : index
    %43 = vector.load %arg9[%42, %c0_39] : memref<16x128xf32, #tpu.memory_space<vmem>>, vector<2x128xf32>
    %44 = arith.truncf %31 : vector<2x32xf32> to vector<2x32xbf16>
    %cst_40 = arith.constant dense<0.000000e+00> : vector<2x128xf32>
    %45 = tpu.matmul %44, %6, %cst_40 {dimension_numbers = #tpu.dot_dimension_numbers<[1], [0], [0], [1], [0, 0, 1, 1], [], []>} : vector<2x32xbf16>, vector<32x128xbf16>, vector<2x128xf32> -> vector<2x128xf32>
    %46 = arith.addf %43, %45 : vector<2x128xf32>
    %47 = vector.extract_strided_slice %40 {offsets = [0, 0], sizes = [2, 96], strides = [1, 1]} : vector<2x128xf32> to vector<2x96xf32>
    %48 = arith.negf %47 : vector<2x96xf32>
    %49 = math.exp %48 : vector<2x96xf32>
    %cst_41 = arith.constant 1.000000e+00 : f32
    %50 = vector.broadcast %cst_41 : f32 to vector<2x96xf32>
    %51 = arith.addf %50, %49 : vector<2x96xf32>
    %52 = arith.divf %50, %51 : vector<2x96xf32>
    %53 = vector.extract_strided_slice %40 {offsets = [0, 96], sizes = [2, 32], strides = [1, 1]} : vector<2x128xf32> to vector<2x32xf32>
    %54 = math.tanh %53 : vector<2x32xf32>
    %55 = vector.extract_strided_slice %52 {offsets = [0, 32], sizes = [2, 32], strides = [1, 1]} : vector<2x96xf32> to vector<2x32xf32>
    %56 = arith.mulf %55, %29 : vector<2x32xf32>
    %57 = vector.extract_strided_slice %52 {offsets = [0, 0], sizes = [2, 32], strides = [1, 1]} : vector<2x96xf32> to vector<2x32xf32>
    %58 = arith.mulf %57, %54 : vector<2x32xf32>
    %59 = arith.addf %56, %58 : vector<2x32xf32>
    %60 = vector.extract_strided_slice %52 {offsets = [0, 64], sizes = [2, 32], strides = [1, 1]} : vector<2x96xf32> to vector<2x32xf32>
    %61 = math.tanh %59 : vector<2x32xf32>
    %62 = arith.mulf %60, %61 : vector<2x32xf32>
    %63 = vector.extract_strided_slice %46 {offsets = [0, 0], sizes = [2, 96], strides = [1, 1]} : vector<2x128xf32> to vector<2x96xf32>
    %64 = arith.negf %63 : vector<2x96xf32>
    %65 = math.exp %64 : vector<2x96xf32>
    %cst_42 = arith.constant 1.000000e+00 : f32
    %66 = vector.broadcast %cst_42 : f32 to vector<2x96xf32>
    %67 = arith.addf %66, %65 : vector<2x96xf32>
    %68 = arith.divf %66, %67 : vector<2x96xf32>
    %69 = vector.extract_strided_slice %46 {offsets = [0, 96], sizes = [2, 32], strides = [1, 1]} : vector<2x128xf32> to vector<2x32xf32>
    %70 = math.tanh %69 : vector<2x32xf32>
    %71 = vector.extract_strided_slice %68 {offsets = [0, 32], sizes = [2, 32], strides = [1, 1]} : vector<2x96xf32> to vector<2x32xf32>
    %72 = arith.mulf %71, %33 : vector<2x32xf32>
    %73 = vector.extract_strided_slice %68 {offsets = [0, 0], sizes = [2, 32], strides = [1, 1]} : vector<2x96xf32> to vector<2x32xf32>
    %74 = arith.mulf %73, %70 : vector<2x32xf32>
    %75 = arith.addf %72, %74 : vector<2x32xf32>
    %76 = vector.extract_strided_slice %68 {offsets = [0, 64], sizes = [2, 32], strides = [1, 1]} : vector<2x96xf32> to vector<2x32xf32>
    %77 = math.tanh %75 : vector<2x32xf32>
    %78 = arith.mulf %76, %77 : vector<2x32xf32>
    %79 = arith.truncf %62 : vector<2x32xf32> to vector<2x32xbf16>
    %80 = arith.index_cast %c0_i32_35 : i32 to index
    %c0_43 = arith.constant 0 : index
    %c0_44 = arith.constant 0 : index
    %81 = vector.load %arg6[%80, %c0_43, %c0_44] : memref<8x2x32xbf16, #tpu.memory_space<vmem>>, vector<1x2x32xbf16>
    %82 = vector.shape_cast %81 : vector<1x2x32xbf16> to vector<2x32xbf16>
    %83 = vector.shape_cast %79 : vector<2x32xbf16> to vector<1x2x32xbf16>
    tpu.vector_store %arg6[%80, %c0_43, %c0_44], %83 {strides = array<i32>} : memref<8x2x32xbf16, #tpu.memory_space<vmem>>, vector<1x2x32xbf16>,
    %84 = arith.truncf %78 : vector<2x32xf32> to vector<2x32xbf16>
    %85 = arith.index_cast %34 : i32 to index
    %c0_45 = arith.constant 0 : index
    %c0_46 = arith.constant 0 : index
    %86 = vector.load %arg7[%85, %c0_45, %c0_46] : memref<8x2x32xbf16, #tpu.memory_space<vmem>>, vector<1x2x32xbf16>
    %87 = vector.shape_cast %86 : vector<1x2x32xbf16> to vector<2x32xbf16>
    %88 = vector.shape_cast %84 : vector<2x32xbf16> to vector<1x2x32xbf16>
    tpu.vector_store %arg7[%85, %c0_45, %c0_46], %88 {strides = array<i32>} : memref<8x2x32xbf16, #tpu.memory_space<vmem>>, vector<1x2x32xbf16>,
    %c1_i32 = arith.constant 1 : i32
    %c7_i32_47 = arith.constant 7 : i32
    %89 = arith.subi %c7_i32_47, %c1_i32 : i32
    %c2_i32_48 = arith.constant 2 : i32
    %90 = arith.muli %c1_i32, %c2_i32_48 : i32
    %91 = arith.index_cast %90 : i32 to index
    %c0_49 = arith.constant 0 : index
    %92 = vector.load %arg8[%91, %c0_49] : memref<16x128xf32, #tpu.memory_space<vmem>>, vector<2x128xf32>
    %93 = arith.truncf %62 : vector<2x32xf32> to vector<2x32xbf16>
    %cst_50 = arith.constant dense<0.000000e+00> : vector<2x128xf32>
    %94 = tpu.matmul %93, %4, %cst_50 {dimension_numbers = #tpu.dot_dimension_numbers<[1], [0], [0], [1], [0, 0, 1, 1], [], []>} : vector<2x32xbf16>, vector<32x128xbf16>, vector<2x128xf32> -> vector<2x128xf32>
    %95 = arith.addf %92, %94 : vector<2x128xf32>
    %c2_i32_51 = arith.constant 2 : i32
    %96 = arith.muli %89, %c2_i32_51 : i32
    %97 = arith.index_cast %96 : i32 to index
    %c0_52 = arith.constant 0 : index
    %98 = vector.load %arg9[%97, %c0_52] : memref<16x128xf32, #tpu.memory_space<vmem>>, vector<2x128xf32>
    %99 = arith.truncf %78 : vector<2x32xf32> to vector<2x32xbf16>
    %cst_53 = arith.constant dense<0.000000e+00> : vector<2x128xf32>
    %100 = tpu.matmul %99, %6, %cst_53 {dimension_numbers = #tpu.dot_dimension_numbers<[1], [0], [0], [1], [0, 0, 1, 1], [], []>} : vector<2x32xbf16>, vector<32x128xbf16>, vector<2x128xf32> -> vector<2x128xf32>
    %101 = arith.addf %98, %100 : vector<2x128xf32>
    %102 = vector.extract_strided_slice %95 {offsets = [0, 0], sizes = [2, 96], strides = [1, 1]} : vector<2x128xf32> to vector<2x96xf32>
    %103 = arith.negf %102 : vector<2x96xf32>
    %104 = math.exp %103 : vector<2x96xf32>
    %cst_54 = arith.constant 1.000000e+00 : f32
    %105 = vector.broadcast %cst_54 : f32 to vector<2x96xf32>
    %106 = arith.addf %105, %104 : vector<2x96xf32>
    %107 = arith.divf %105, %106 : vector<2x96xf32>
    %108 = vector.extract_strided_slice %95 {offsets = [0, 96], sizes = [2, 32], strides = [1, 1]} : vector<2x128xf32> to vector<2x32xf32>
    %109 = math.tanh %108 : vector<2x32xf32>
    %110 = vector.extract_strided_slice %107 {offsets = [0, 32], sizes = [2, 32], strides = [1, 1]} : vector<2x96xf32> to vector<2x32xf32>
    %111 = arith.mulf %110, %59 : vector<2x32xf32>
    %112 = vector.extract_strided_slice %107 {offsets = [0, 0], sizes = [2, 32], strides = [1, 1]} : vector<2x96xf32> to vector<2x32xf32>
    %113 = arith.mulf %112, %109 : vector<2x32xf32>
    %114 = arith.addf %111, %113 : vector<2x32xf32>
    %115 = vector.extract_strided_slice %107 {offsets = [0, 64], sizes = [2, 32], strides = [1, 1]} : vector<2x96xf32> to vector<2x32xf32>
    %116 = math.tanh %114 : vector<2x32xf32>
    %117 = arith.mulf %115, %116 : vector<2x32xf32>
    %118 = vector.extract_strided_slice %101 {offsets = [0, 0], sizes = [2, 96], strides = [1, 1]} : vector<2x128xf32> to vector<2x96xf32>
    %119 = arith.negf %118 : vector<2x96xf32>
    %120 = math.exp %119 : vector<2x96xf32>
    %cst_55 = arith.constant 1.000000e+00 : f32
    %121 = vector.broadcast %cst_55 : f32 to vector<2x96xf32>
    %122 = arith.addf %121, %120 : vector<2x96xf32>
    %123 = arith.divf %121, %122 : vector<2x96xf32>
    %124 = vector.extract_strided_slice %101 {offsets = [0, 96], sizes = [2, 32], strides = [1, 1]} : vector<2x128xf32> to vector<2x32xf32>
    %125 = math.tanh %124 : vector<2x32xf32>
    %126 = vector.extract_strided_slice %123 {offsets = [0, 32], sizes = [2, 32], strides = [1, 1]} : vector<2x96xf32> to vector<2x32xf32>
    %127 = arith.mulf %126, %75 : vector<2x32xf32>
    %128 = vector.extract_strided_slice %123 {offsets = [0, 0], sizes = [2, 32], strides = [1, 1]} : vector<2x96xf32> to vector<2x32xf32>
    %129 = arith.mulf %128, %125 : vector<2x32xf32>
    %130 = arith.addf %127, %129 : vector<2x32xf32>
    %131 = vector.extract_strided_slice %123 {offsets = [0, 64], sizes = [2, 32], strides = [1, 1]} : vector<2x96xf32> to vector<2x32xf32>
    %132 = math.tanh %130 : vector<2x32xf32>
    %133 = arith.mulf %131, %132 : vector<2x32xf32>
    %134 = arith.truncf %117 : vector<2x32xf32> to vector<2x32xbf16>
    %135 = arith.index_cast %c1_i32 : i32 to index
    %c0_56 = arith.constant 0 : index
    %c0_57 = arith.constant 0 : index
    %136 = vector.load %arg6[%135, %c0_56, %c0_57] : memref<8x2x32xbf16, #tpu.memory_space<vmem>>, vector<1x2x32xbf16>
    %137 = vector.shape_cast %136 : vector<1x2x32xbf16> to vector<2x32xbf16>
    %138 = vector.shape_cast %134 : vector<2x32xbf16> to vector<1x2x32xbf16>
    tpu.vector_store %arg6[%135, %c0_56, %c0_57], %138 {strides = array<i32>} : memref<8x2x32xbf16, #tpu.memory_space<vmem>>, vector<1x2x32xbf16>,
    %139 = arith.truncf %133 : vector<2x32xf32> to vector<2x32xbf16>
    %140 = arith.index_cast %89 : i32 to index
    %c0_58 = arith.constant 0 : index
    %c0_59 = arith.constant 0 : index
    %141 = vector.load %arg7[%140, %c0_58, %c0_59] : memref<8x2x32xbf16, #tpu.memory_space<vmem>>, vector<1x2x32xbf16>
    %142 = vector.shape_cast %141 : vector<1x2x32xbf16> to vector<2x32xbf16>
    %143 = vector.shape_cast %139 : vector<2x32xbf16> to vector<1x2x32xbf16>
    tpu.vector_store %arg7[%140, %c0_58, %c0_59], %143 {strides = array<i32>} : memref<8x2x32xbf16, #tpu.memory_space<vmem>>, vector<1x2x32xbf16>,
    %c2_i32_60 = arith.constant 2 : i32
    %c7_i32_61 = arith.constant 7 : i32
    %144 = arith.subi %c7_i32_61, %c2_i32_60 : i32
    %c2_i32_62 = arith.constant 2 : i32
    %145 = arith.muli %c2_i32_60, %c2_i32_62 : i32
    %146 = arith.index_cast %145 : i32 to index
    %c0_63 = arith.constant 0 : index
    %147 = vector.load %arg8[%146, %c0_63] : memref<16x128xf32, #tpu.memory_space<vmem>>, vector<2x128xf32>
    %148 = arith.truncf %117 : vector<2x32xf32> to vector<2x32xbf16>
    %cst_64 = arith.constant dense<0.000000e+00> : vector<2x128xf32>
    %149 = tpu.matmul %148, %4, %cst_64 {dimension_numbers = #tpu.dot_dimension_numbers<[1], [0], [0], [1], [0, 0, 1, 1], [], []>} : vector<2x32xbf16>, vector<32x128xbf16>, vector<2x128xf32> -> vector<2x128xf32>
    %150 = arith.addf %147, %149 : vector<2x128xf32>
    %c2_i32_65 = arith.constant 2 : i32
    %151 = arith.muli %144, %c2_i32_65 : i32
    %152 = arith.index_cast %151 : i32 to index
    %c0_66 = arith.constant 0 : index
    %153 = vector.load %arg9[%152, %c0_66] : memref<16x128xf32, #tpu.memory_space<vmem>>, vector<2x128xf32>
    %154 = arith.truncf %133 : vector<2x32xf32> to vector<2x32xbf16>
    %cst_67 = arith.constant dense<0.000000e+00> : vector<2x128xf32>
    %155 = tpu.matmul %154, %6, %cst_67 {dimension_numbers = #tpu.dot_dimension_numbers<[1], [0], [0], [1], [0, 0, 1, 1], [], []>} : vector<2x32xbf16>, vector<32x128xbf16>, vector<2x128xf32> -> vector<2x128xf32>
    %156 = arith.addf %153, %155 : vector<2x128xf32>
    %157 = vector.extract_strided_slice %150 {offsets = [0, 0], sizes = [2, 96], strides = [1, 1]} : vector<2x128xf32> to vector<2x96xf32>
    %158 = arith.negf %157 : vector<2x96xf32>
    %159 = math.exp %158 : vector<2x96xf32>
    %cst_68 = arith.constant 1.000000e+00 : f32
    %160 = vector.broadcast %cst_68 : f32 to vector<2x96xf32>
    %161 = arith.addf %160, %159 : vector<2x96xf32>
    %162 = arith.divf %160, %161 : vector<2x96xf32>
    %163 = vector.extract_strided_slice %150 {offsets = [0, 96], sizes = [2, 32], strides = [1, 1]} : vector<2x128xf32> to vector<2x32xf32>
    %164 = math.tanh %163 : vector<2x32xf32>
    %165 = vector.extract_strided_slice %162 {offsets = [0, 32], sizes = [2, 32], strides = [1, 1]} : vector<2x96xf32> to vector<2x32xf32>
    %166 = arith.mulf %165, %114 : vector<2x32xf32>
    %167 = vector.extract_strided_slice %162 {offsets = [0, 0], sizes = [2, 32], strides = [1, 1]} : vector<2x96xf32> to vector<2x32xf32>
    %168 = arith.mulf %167, %164 : vector<2x32xf32>
    %169 = arith.addf %166, %168 : vector<2x32xf32>
    %170 = vector.extract_strided_slice %162 {offsets = [0, 64], sizes = [2, 32], strides = [1, 1]} : vector<2x96xf32> to vector<2x32xf32>
    %171 = math.tanh %169 : vector<2x32xf32>
    %172 = arith.mulf %170, %171 : vector<2x32xf32>
    %173 = vector.extract_strided_slice %156 {offsets = [0, 0], sizes = [2, 96], strides = [1, 1]} : vector<2x128xf32> to vector<2x96xf32>
    %174 = arith.negf %173 : vector<2x96xf32>
    %175 = math.exp %174 : vector<2x96xf32>
    %cst_69 = arith.constant 1.000000e+00 : f32
    %176 = vector.broadcast %cst_69 : f32 to vector<2x96xf32>
    %177 = arith.addf %176, %175 : vector<2x96xf32>
    %178 = arith.divf %176, %177 : vector<2x96xf32>
    %179 = vector.extract_strided_slice %156 {offsets = [0, 96], sizes = [2, 32], strides = [1, 1]} : vector<2x128xf32> to vector<2x32xf32>
    %180 = math.tanh %179 : vector<2x32xf32>
    %181 = vector.extract_strided_slice %178 {offsets = [0, 32], sizes = [2, 32], strides = [1, 1]} : vector<2x96xf32> to vector<2x32xf32>
    %182 = arith.mulf %181, %130 : vector<2x32xf32>
    %183 = vector.extract_strided_slice %178 {offsets = [0, 0], sizes = [2, 32], strides = [1, 1]} : vector<2x96xf32> to vector<2x32xf32>
    %184 = arith.mulf %183, %180 : vector<2x32xf32>
    %185 = arith.addf %182, %184 : vector<2x32xf32>
    %186 = vector.extract_strided_slice %178 {offsets = [0, 64], sizes = [2, 32], strides = [1, 1]} : vector<2x96xf32> to vector<2x32xf32>
    %187 = math.tanh %185 : vector<2x32xf32>
    %188 = arith.mulf %186, %187 : vector<2x32xf32>
    %189 = arith.truncf %172 : vector<2x32xf32> to vector<2x32xbf16>
    %190 = arith.index_cast %c2_i32_60 : i32 to index
    %c0_70 = arith.constant 0 : index
    %c0_71 = arith.constant 0 : index
    %191 = vector.load %arg6[%190, %c0_70, %c0_71] : memref<8x2x32xbf16, #tpu.memory_space<vmem>>, vector<1x2x32xbf16>
    %192 = vector.shape_cast %191 : vector<1x2x32xbf16> to vector<2x32xbf16>
    %193 = vector.shape_cast %189 : vector<2x32xbf16> to vector<1x2x32xbf16>
    tpu.vector_store %arg6[%190, %c0_70, %c0_71], %193 {strides = array<i32>} : memref<8x2x32xbf16, #tpu.memory_space<vmem>>, vector<1x2x32xbf16>,
    %194 = arith.truncf %188 : vector<2x32xf32> to vector<2x32xbf16>
    %195 = arith.index_cast %144 : i32 to index
    %c0_72 = arith.constant 0 : index
    %c0_73 = arith.constant 0 : index
    %196 = vector.load %arg7[%195, %c0_72, %c0_73] : memref<8x2x32xbf16, #tpu.memory_space<vmem>>, vector<1x2x32xbf16>
    %197 = vector.shape_cast %196 : vector<1x2x32xbf16> to vector<2x32xbf16>
    %198 = vector.shape_cast %194 : vector<2x32xbf16> to vector<1x2x32xbf16>
    tpu.vector_store %arg7[%195, %c0_72, %c0_73], %198 {strides = array<i32>} : memref<8x2x32xbf16, #tpu.memory_space<vmem>>, vector<1x2x32xbf16>,
    %c3_i32 = arith.constant 3 : i32
    %c7_i32_74 = arith.constant 7 : i32
    %199 = arith.subi %c7_i32_74, %c3_i32 : i32
    %c2_i32_75 = arith.constant 2 : i32
    %200 = arith.muli %c3_i32, %c2_i32_75 : i32
    %201 = arith.index_cast %200 : i32 to index
    %c0_76 = arith.constant 0 : index
    %202 = vector.load %arg8[%201, %c0_76] : memref<16x128xf32, #tpu.memory_space<vmem>>, vector<2x128xf32>
    %203 = arith.truncf %172 : vector<2x32xf32> to vector<2x32xbf16>
    %cst_77 = arith.constant dense<0.000000e+00> : vector<2x128xf32>
    %204 = tpu.matmul %203, %4, %cst_77 {dimension_numbers = #tpu.dot_dimension_numbers<[1], [0], [0], [1], [0, 0, 1, 1], [], []>} : vector<2x32xbf16>, vector<32x128xbf16>, vector<2x128xf32> -> vector<2x128xf32>
    %205 = arith.addf %202, %204 : vector<2x128xf32>
    %c2_i32_78 = arith.constant 2 : i32
    %206 = arith.muli %199, %c2_i32_78 : i32
    %207 = arith.index_cast %206 : i32 to index
    %c0_79 = arith.constant 0 : index
    %208 = vector.load %arg9[%207, %c0_79] : memref<16x128xf32, #tpu.memory_space<vmem>>, vector<2x128xf32>
    %209 = arith.truncf %188 : vector<2x32xf32> to vector<2x32xbf16>
    %cst_80 = arith.constant dense<0.000000e+00> : vector<2x128xf32>
    %210 = tpu.matmul %209, %6, %cst_80 {dimension_numbers = #tpu.dot_dimension_numbers<[1], [0], [0], [1], [0, 0, 1, 1], [], []>} : vector<2x32xbf16>, vector<32x128xbf16>, vector<2x128xf32> -> vector<2x128xf32>
    %211 = arith.addf %208, %210 : vector<2x128xf32>
    %212 = vector.extract_strided_slice %205 {offsets = [0, 0], sizes = [2, 96], strides = [1, 1]} : vector<2x128xf32> to vector<2x96xf32>
    %213 = arith.negf %212 : vector<2x96xf32>
    %214 = math.exp %213 : vector<2x96xf32>
    %cst_81 = arith.constant 1.000000e+00 : f32
    %215 = vector.broadcast %cst_81 : f32 to vector<2x96xf32>
    %216 = arith.addf %215, %214 : vector<2x96xf32>
    %217 = arith.divf %215, %216 : vector<2x96xf32>
    %218 = vector.extract_strided_slice %205 {offsets = [0, 96], sizes = [2, 32], strides = [1, 1]} : vector<2x128xf32> to vector<2x32xf32>
    %219 = math.tanh %218 : vector<2x32xf32>
    %220 = vector.extract_strided_slice %217 {offsets = [0, 32], sizes = [2, 32], strides = [1, 1]} : vector<2x96xf32> to vector<2x32xf32>
    %221 = arith.mulf %220, %169 : vector<2x32xf32>
    %222 = vector.extract_strided_slice %217 {offsets = [0, 0], sizes = [2, 32], strides = [1, 1]} : vector<2x96xf32> to vector<2x32xf32>
    %223 = arith.mulf %222, %219 : vector<2x32xf32>
    %224 = arith.addf %221, %223 : vector<2x32xf32>
    %225 = vector.extract_strided_slice %217 {offsets = [0, 64], sizes = [2, 32], strides = [1, 1]} : vector<2x96xf32> to vector<2x32xf32>
    %226 = math.tanh %224 : vector<2x32xf32>
    %227 = arith.mulf %225, %226 : vector<2x32xf32>
    %228 = vector.extract_strided_slice %211 {offsets = [0, 0], sizes = [2, 96], strides = [1, 1]} : vector<2x128xf32> to vector<2x96xf32>
    %229 = arith.negf %228 : vector<2x96xf32>
    %230 = math.exp %229 : vector<2x96xf32>
    %cst_82 = arith.constant 1.000000e+00 : f32
    %231 = vector.broadcast %cst_82 : f32 to vector<2x96xf32>
    %232 = arith.addf %231, %230 : vector<2x96xf32>
    %233 = arith.divf %231, %232 : vector<2x96xf32>
    %234 = vector.extract_strided_slice %211 {offsets = [0, 96], sizes = [2, 32], strides = [1, 1]} : vector<2x128xf32> to vector<2x32xf32>
    %235 = math.tanh %234 : vector<2x32xf32>
    %236 = vector.extract_strided_slice %233 {offsets = [0, 32], sizes = [2, 32], strides = [1, 1]} : vector<2x96xf32> to vector<2x32xf32>
    %237 = arith.mulf %236, %185 : vector<2x32xf32>
    %238 = vector.extract_strided_slice %233 {offsets = [0, 0], sizes = [2, 32], strides = [1, 1]} : vector<2x96xf32> to vector<2x32xf32>
    %239 = arith.mulf %238, %235 : vector<2x32xf32>
    %240 = arith.addf %237, %239 : vector<2x32xf32>
    %241 = vector.extract_strided_slice %233 {offsets = [0, 64], sizes = [2, 32], strides = [1, 1]} : vector<2x96xf32> to vector<2x32xf32>
    %242 = math.tanh %240 : vector<2x32xf32>
    %243 = arith.mulf %241, %242 : vector<2x32xf32>
    %244 = arith.truncf %227 : vector<2x32xf32> to vector<2x32xbf16>
    %245 = arith.index_cast %c3_i32 : i32 to index
    %c0_83 = arith.constant 0 : index
    %c0_84 = arith.constant 0 : index
    %246 = vector.load %arg6[%245, %c0_83, %c0_84] : memref<8x2x32xbf16, #tpu.memory_space<vmem>>, vector<1x2x32xbf16>
    %247 = vector.shape_cast %246 : vector<1x2x32xbf16> to vector<2x32xbf16>
    %248 = vector.shape_cast %244 : vector<2x32xbf16> to vector<1x2x32xbf16>
    tpu.vector_store %arg6[%245, %c0_83, %c0_84], %248 {strides = array<i32>} : memref<8x2x32xbf16, #tpu.memory_space<vmem>>, vector<1x2x32xbf16>,
    %249 = arith.truncf %243 : vector<2x32xf32> to vector<2x32xbf16>
    %250 = arith.index_cast %199 : i32 to index
    %c0_85 = arith.constant 0 : index
    %c0_86 = arith.constant 0 : index
    %251 = vector.load %arg7[%250, %c0_85, %c0_86] : memref<8x2x32xbf16, #tpu.memory_space<vmem>>, vector<1x2x32xbf16>
    %252 = vector.shape_cast %251 : vector<1x2x32xbf16> to vector<2x32xbf16>
    %253 = vector.shape_cast %249 : vector<2x32xbf16> to vector<1x2x32xbf16>
    tpu.vector_store %arg7[%250, %c0_85, %c0_86], %253 {strides = array<i32>} : memref<8x2x32xbf16, #tpu.memory_space<vmem>>, vector<1x2x32xbf16>,
    %c4_i32 = arith.constant 4 : i32
    %c7_i32_87 = arith.constant 7 : i32
    %254 = arith.subi %c7_i32_87, %c4_i32 : i32
    %c2_i32_88 = arith.constant 2 : i32
    %255 = arith.muli %c4_i32, %c2_i32_88 : i32
    %256 = arith.index_cast %255 : i32 to index
    %c0_89 = arith.constant 0 : index
    %257 = vector.load %arg8[%256, %c0_89] : memref<16x128xf32, #tpu.memory_space<vmem>>, vector<2x128xf32>
    %258 = arith.truncf %227 : vector<2x32xf32> to vector<2x32xbf16>
    %cst_90 = arith.constant dense<0.000000e+00> : vector<2x128xf32>
    %259 = tpu.matmul %258, %4, %cst_90 {dimension_numbers = #tpu.dot_dimension_numbers<[1], [0], [0], [1], [0, 0, 1, 1], [], []>} : vector<2x32xbf16>, vector<32x128xbf16>, vector<2x128xf32> -> vector<2x128xf32>
    %260 = arith.addf %257, %259 : vector<2x128xf32>
    %c2_i32_91 = arith.constant 2 : i32
    %261 = arith.muli %254, %c2_i32_91 : i32
    %262 = arith.index_cast %261 : i32 to index
    %c0_92 = arith.constant 0 : index
    %263 = vector.load %arg9[%262, %c0_92] : memref<16x128xf32, #tpu.memory_space<vmem>>, vector<2x128xf32>
    %264 = arith.truncf %243 : vector<2x32xf32> to vector<2x32xbf16>
    %cst_93 = arith.constant dense<0.000000e+00> : vector<2x128xf32>
    %265 = tpu.matmul %264, %6, %cst_93 {dimension_numbers = #tpu.dot_dimension_numbers<[1], [0], [0], [1], [0, 0, 1, 1], [], []>} : vector<2x32xbf16>, vector<32x128xbf16>, vector<2x128xf32> -> vector<2x128xf32>
    %266 = arith.addf %263, %265 : vector<2x128xf32>
    %267 = vector.extract_strided_slice %260 {offsets = [0, 0], sizes = [2, 96], strides = [1, 1]} : vector<2x128xf32> to vector<2x96xf32>
    %268 = arith.negf %267 : vector<2x96xf32>
    %269 = math.exp %268 : vector<2x96xf32>
    %cst_94 = arith.constant 1.000000e+00 : f32
    %270 = vector.broadcast %cst_94 : f32 to vector<2x96xf32>
    %271 = arith.addf %270, %269 : vector<2x96xf32>
    %272 = arith.divf %270, %271 : vector<2x96xf32>
    %273 = vector.extract_strided_slice %260 {offsets = [0, 96], sizes = [2, 32], strides = [1, 1]} : vector<2x128xf32> to vector<2x32xf32>
    %274 = math.tanh %273 : vector<2x32xf32>
    %275 = vector.extract_strided_slice %272 {offsets = [0, 32], sizes = [2, 32], strides = [1, 1]} : vector<2x96xf32> to vector<2x32xf32>
    %276 = arith.mulf %275, %224 : vector<2x32xf32>
    %277 = vector.extract_strided_slice %272 {offsets = [0, 0], sizes = [2, 32], strides = [1, 1]} : vector<2x96xf32> to vector<2x32xf32>
    %278 = arith.mulf %277, %274 : vector<2x32xf32>
    %279 = arith.addf %276, %278 : vector<2x32xf32>
    %280 = vector.extract_strided_slice %272 {offsets = [0, 64], sizes = [2, 32], strides = [1, 1]} : vector<2x96xf32> to vector<2x32xf32>
    %281 = math.tanh %279 : vector<2x32xf32>
    %282 = arith.mulf %280, %281 : vector<2x32xf32>
    %283 = vector.extract_strided_slice %266 {offsets = [0, 0], sizes = [2, 96], strides = [1, 1]} : vector<2x128xf32> to vector<2x96xf32>
    %284 = arith.negf %283 : vector<2x96xf32>
    %285 = math.exp %284 : vector<2x96xf32>
    %cst_95 = arith.constant 1.000000e+00 : f32
    %286 = vector.broadcast %cst_95 : f32 to vector<2x96xf32>
    %287 = arith.addf %286, %285 : vector<2x96xf32>
    %288 = arith.divf %286, %287 : vector<2x96xf32>
    %289 = vector.extract_strided_slice %266 {offsets = [0, 96], sizes = [2, 32], strides = [1, 1]} : vector<2x128xf32> to vector<2x32xf32>
    %290 = math.tanh %289 : vector<2x32xf32>
    %291 = vector.extract_strided_slice %288 {offsets = [0, 32], sizes = [2, 32], strides = [1, 1]} : vector<2x96xf32> to vector<2x32xf32>
    %292 = arith.mulf %291, %240 : vector<2x32xf32>
    %293 = vector.extract_strided_slice %288 {offsets = [0, 0], sizes = [2, 32], strides = [1, 1]} : vector<2x96xf32> to vector<2x32xf32>
    %294 = arith.mulf %293, %290 : vector<2x32xf32>
    %295 = arith.addf %292, %294 : vector<2x32xf32>
    %296 = vector.extract_strided_slice %288 {offsets = [0, 64], sizes = [2, 32], strides = [1, 1]} : vector<2x96xf32> to vector<2x32xf32>
    %297 = math.tanh %295 : vector<2x32xf32>
    %298 = arith.mulf %296, %297 : vector<2x32xf32>
    %299 = arith.truncf %282 : vector<2x32xf32> to vector<2x32xbf16>
    %300 = arith.index_cast %c4_i32 : i32 to index
    %c0_96 = arith.constant 0 : index
    %c0_97 = arith.constant 0 : index
    %301 = vector.load %arg6[%300, %c0_96, %c0_97] : memref<8x2x32xbf16, #tpu.memory_space<vmem>>, vector<1x2x32xbf16>
    %302 = vector.shape_cast %301 : vector<1x2x32xbf16> to vector<2x32xbf16>
    %303 = vector.shape_cast %299 : vector<2x32xbf16> to vector<1x2x32xbf16>
    tpu.vector_store %arg6[%300, %c0_96, %c0_97], %303 {strides = array<i32>} : memref<8x2x32xbf16, #tpu.memory_space<vmem>>, vector<1x2x32xbf16>,
    %304 = arith.truncf %298 : vector<2x32xf32> to vector<2x32xbf16>
    %305 = arith.index_cast %254 : i32 to index
    %c0_98 = arith.constant 0 : index
    %c0_99 = arith.constant 0 : index
    %306 = vector.load %arg7[%305, %c0_98, %c0_99] : memref<8x2x32xbf16, #tpu.memory_space<vmem>>, vector<1x2x32xbf16>
    %307 = vector.shape_cast %306 : vector<1x2x32xbf16> to vector<2x32xbf16>
    %308 = vector.shape_cast %304 : vector<2x32xbf16> to vector<1x2x32xbf16>
    tpu.vector_store %arg7[%305, %c0_98, %c0_99], %308 {strides = array<i32>} : memref<8x2x32xbf16, #tpu.memory_space<vmem>>, vector<1x2x32xbf16>,
    %c5_i32 = arith.constant 5 : i32
    %c7_i32_100 = arith.constant 7 : i32
    %309 = arith.subi %c7_i32_100, %c5_i32 : i32
    %c2_i32_101 = arith.constant 2 : i32
    %310 = arith.muli %c5_i32, %c2_i32_101 : i32
    %311 = arith.index_cast %310 : i32 to index
    %c0_102 = arith.constant 0 : index
    %312 = vector.load %arg8[%311, %c0_102] : memref<16x128xf32, #tpu.memory_space<vmem>>, vector<2x128xf32>
    %313 = arith.truncf %282 : vector<2x32xf32> to vector<2x32xbf16>
    %cst_103 = arith.constant dense<0.000000e+00> : vector<2x128xf32>
    %314 = tpu.matmul %313, %4, %cst_103 {dimension_numbers = #tpu.dot_dimension_numbers<[1], [0], [0], [1], [0, 0, 1, 1], [], []>} : vector<2x32xbf16>, vector<32x128xbf16>, vector<2x128xf32> -> vector<2x128xf32>
    %315 = arith.addf %312, %314 : vector<2x128xf32>
    %c2_i32_104 = arith.constant 2 : i32
    %316 = arith.muli %309, %c2_i32_104 : i32
    %317 = arith.index_cast %316 : i32 to index
    %c0_105 = arith.constant 0 : index
    %318 = vector.load %arg9[%317, %c0_105] : memref<16x128xf32, #tpu.memory_space<vmem>>, vector<2x128xf32>
    %319 = arith.truncf %298 : vector<2x32xf32> to vector<2x32xbf16>
    %cst_106 = arith.constant dense<0.000000e+00> : vector<2x128xf32>
    %320 = tpu.matmul %319, %6, %cst_106 {dimension_numbers = #tpu.dot_dimension_numbers<[1], [0], [0], [1], [0, 0, 1, 1], [], []>} : vector<2x32xbf16>, vector<32x128xbf16>, vector<2x128xf32> -> vector<2x128xf32>
    %321 = arith.addf %318, %320 : vector<2x128xf32>
    %322 = vector.extract_strided_slice %315 {offsets = [0, 0], sizes = [2, 96], strides = [1, 1]} : vector<2x128xf32> to vector<2x96xf32>
    %323 = arith.negf %322 : vector<2x96xf32>
    %324 = math.exp %323 : vector<2x96xf32>
    %cst_107 = arith.constant 1.000000e+00 : f32
    %325 = vector.broadcast %cst_107 : f32 to vector<2x96xf32>
    %326 = arith.addf %325, %324 : vector<2x96xf32>
    %327 = arith.divf %325, %326 : vector<2x96xf32>
    %328 = vector.extract_strided_slice %315 {offsets = [0, 96], sizes = [2, 32], strides = [1, 1]} : vector<2x128xf32> to vector<2x32xf32>
    %329 = math.tanh %328 : vector<2x32xf32>
    %330 = vector.extract_strided_slice %327 {offsets = [0, 32], sizes = [2, 32], strides = [1, 1]} : vector<2x96xf32> to vector<2x32xf32>
    %331 = arith.mulf %330, %279 : vector<2x32xf32>
    %332 = vector.extract_strided_slice %327 {offsets = [0, 0], sizes = [2, 32], strides = [1, 1]} : vector<2x96xf32> to vector<2x32xf32>
    %333 = arith.mulf %332, %329 : vector<2x32xf32>
    %334 = arith.addf %331, %333 : vector<2x32xf32>
    %335 = vector.extract_strided_slice %327 {offsets = [0, 64], sizes = [2, 32], strides = [1, 1]} : vector<2x96xf32> to vector<2x32xf32>
    %336 = math.tanh %334 : vector<2x32xf32>
    %337 = arith.mulf %335, %336 : vector<2x32xf32>
    %338 = vector.extract_strided_slice %321 {offsets = [0, 0], sizes = [2, 96], strides = [1, 1]} : vector<2x128xf32> to vector<2x96xf32>
    %339 = arith.negf %338 : vector<2x96xf32>
    %340 = math.exp %339 : vector<2x96xf32>
    %cst_108 = arith.constant 1.000000e+00 : f32
    %341 = vector.broadcast %cst_108 : f32 to vector<2x96xf32>
    %342 = arith.addf %341, %340 : vector<2x96xf32>
    %343 = arith.divf %341, %342 : vector<2x96xf32>
    %344 = vector.extract_strided_slice %321 {offsets = [0, 96], sizes = [2, 32], strides = [1, 1]} : vector<2x128xf32> to vector<2x32xf32>
    %345 = math.tanh %344 : vector<2x32xf32>
    %346 = vector.extract_strided_slice %343 {offsets = [0, 32], sizes = [2, 32], strides = [1, 1]} : vector<2x96xf32> to vector<2x32xf32>
    %347 = arith.mulf %346, %295 : vector<2x32xf32>
    %348 = vector.extract_strided_slice %343 {offsets = [0, 0], sizes = [2, 32], strides = [1, 1]} : vector<2x96xf32> to vector<2x32xf32>
    %349 = arith.mulf %348, %345 : vector<2x32xf32>
    %350 = arith.addf %347, %349 : vector<2x32xf32>
    %351 = vector.extract_strided_slice %343 {offsets = [0, 64], sizes = [2, 32], strides = [1, 1]} : vector<2x96xf32> to vector<2x32xf32>
    %352 = math.tanh %350 : vector<2x32xf32>
    %353 = arith.mulf %351, %352 : vector<2x32xf32>
    %354 = arith.truncf %337 : vector<2x32xf32> to vector<2x32xbf16>
    %355 = arith.index_cast %c5_i32 : i32 to index
    %c0_109 = arith.constant 0 : index
    %c0_110 = arith.constant 0 : index
    %356 = vector.load %arg6[%355, %c0_109, %c0_110] : memref<8x2x32xbf16, #tpu.memory_space<vmem>>, vector<1x2x32xbf16>
    %357 = vector.shape_cast %356 : vector<1x2x32xbf16> to vector<2x32xbf16>
    %358 = vector.shape_cast %354 : vector<2x32xbf16> to vector<1x2x32xbf16>
    tpu.vector_store %arg6[%355, %c0_109, %c0_110], %358 {strides = array<i32>} : memref<8x2x32xbf16, #tpu.memory_space<vmem>>, vector<1x2x32xbf16>,
    %359 = arith.truncf %353 : vector<2x32xf32> to vector<2x32xbf16>
    %360 = arith.index_cast %309 : i32 to index
    %c0_111 = arith.constant 0 : index
    %c0_112 = arith.constant 0 : index
    %361 = vector.load %arg7[%360, %c0_111, %c0_112] : memref<8x2x32xbf16, #tpu.memory_space<vmem>>, vector<1x2x32xbf16>
    %362 = vector.shape_cast %361 : vector<1x2x32xbf16> to vector<2x32xbf16>
    %363 = vector.shape_cast %359 : vector<2x32xbf16> to vector<1x2x32xbf16>
    tpu.vector_store %arg7[%360, %c0_111, %c0_112], %363 {strides = array<i32>} : memref<8x2x32xbf16, #tpu.memory_space<vmem>>, vector<1x2x32xbf16>,
    %c6_i32 = arith.constant 6 : i32
    %c7_i32_113 = arith.constant 7 : i32
    %364 = arith.subi %c7_i32_113, %c6_i32 : i32
    %c2_i32_114 = arith.constant 2 : i32
    %365 = arith.muli %c6_i32, %c2_i32_114 : i32
    %366 = arith.index_cast %365 : i32 to index
    %c0_115 = arith.constant 0 : index
    %367 = vector.load %arg8[%366, %c0_115] : memref<16x128xf32, #tpu.memory_space<vmem>>, vector<2x128xf32>
    %368 = arith.truncf %337 : vector<2x32xf32> to vector<2x32xbf16>
    %cst_116 = arith.constant dense<0.000000e+00> : vector<2x128xf32>
    %369 = tpu.matmul %368, %4, %cst_116 {dimension_numbers = #tpu.dot_dimension_numbers<[1], [0], [0], [1], [0, 0, 1, 1], [], []>} : vector<2x32xbf16>, vector<32x128xbf16>, vector<2x128xf32> -> vector<2x128xf32>
    %370 = arith.addf %367, %369 : vector<2x128xf32>
    %c2_i32_117 = arith.constant 2 : i32
    %371 = arith.muli %364, %c2_i32_117 : i32
    %372 = arith.index_cast %371 : i32 to index
    %c0_118 = arith.constant 0 : index
    %373 = vector.load %arg9[%372, %c0_118] : memref<16x128xf32, #tpu.memory_space<vmem>>, vector<2x128xf32>
    %374 = arith.truncf %353 : vector<2x32xf32> to vector<2x32xbf16>
    %cst_119 = arith.constant dense<0.000000e+00> : vector<2x128xf32>
    %375 = tpu.matmul %374, %6, %cst_119 {dimension_numbers = #tpu.dot_dimension_numbers<[1], [0], [0], [1], [0, 0, 1, 1], [], []>} : vector<2x32xbf16>, vector<32x128xbf16>, vector<2x128xf32> -> vector<2x128xf32>
    %376 = arith.addf %373, %375 : vector<2x128xf32>
    %377 = vector.extract_strided_slice %370 {offsets = [0, 0], sizes = [2, 96], strides = [1, 1]} : vector<2x128xf32> to vector<2x96xf32>
    %378 = arith.negf %377 : vector<2x96xf32>
    %379 = math.exp %378 : vector<2x96xf32>
    %cst_120 = arith.constant 1.000000e+00 : f32
    %380 = vector.broadcast %cst_120 : f32 to vector<2x96xf32>
    %381 = arith.addf %380, %379 : vector<2x96xf32>
    %382 = arith.divf %380, %381 : vector<2x96xf32>
    %383 = vector.extract_strided_slice %370 {offsets = [0, 96], sizes = [2, 32], strides = [1, 1]} : vector<2x128xf32> to vector<2x32xf32>
    %384 = math.tanh %383 : vector<2x32xf32>
    %385 = vector.extract_strided_slice %382 {offsets = [0, 32], sizes = [2, 32], strides = [1, 1]} : vector<2x96xf32> to vector<2x32xf32>
    %386 = arith.mulf %385, %334 : vector<2x32xf32>
    %387 = vector.extract_strided_slice %382 {offsets = [0, 0], sizes = [2, 32], strides = [1, 1]} : vector<2x96xf32> to vector<2x32xf32>
    %388 = arith.mulf %387, %384 : vector<2x32xf32>
    %389 = arith.addf %386, %388 : vector<2x32xf32>
    %390 = vector.extract_strided_slice %382 {offsets = [0, 64], sizes = [2, 32], strides = [1, 1]} : vector<2x96xf32> to vector<2x32xf32>
    %391 = math.tanh %389 : vector<2x32xf32>
    %392 = arith.mulf %390, %391 : vector<2x32xf32>
    %393 = vector.extract_strided_slice %376 {offsets = [0, 0], sizes = [2, 96], strides = [1, 1]} : vector<2x128xf32> to vector<2x96xf32>
    %394 = arith.negf %393 : vector<2x96xf32>
    %395 = math.exp %394 : vector<2x96xf32>
    %cst_121 = arith.constant 1.000000e+00 : f32
    %396 = vector.broadcast %cst_121 : f32 to vector<2x96xf32>
    %397 = arith.addf %396, %395 : vector<2x96xf32>
    %398 = arith.divf %396, %397 : vector<2x96xf32>
    %399 = vector.extract_strided_slice %376 {offsets = [0, 96], sizes = [2, 32], strides = [1, 1]} : vector<2x128xf32> to vector<2x32xf32>
    %400 = math.tanh %399 : vector<2x32xf32>
    %401 = vector.extract_strided_slice %398 {offsets = [0, 32], sizes = [2, 32], strides = [1, 1]} : vector<2x96xf32> to vector<2x32xf32>
    %402 = arith.mulf %401, %350 : vector<2x32xf32>
    %403 = vector.extract_strided_slice %398 {offsets = [0, 0], sizes = [2, 32], strides = [1, 1]} : vector<2x96xf32> to vector<2x32xf32>
    %404 = arith.mulf %403, %400 : vector<2x32xf32>
    %405 = arith.addf %402, %404 : vector<2x32xf32>
    %406 = vector.extract_strided_slice %398 {offsets = [0, 64], sizes = [2, 32], strides = [1, 1]} : vector<2x96xf32> to vector<2x32xf32>
    %407 = math.tanh %405 : vector<2x32xf32>
    %408 = arith.mulf %406, %407 : vector<2x32xf32>
    %409 = arith.truncf %392 : vector<2x32xf32> to vector<2x32xbf16>
    %410 = arith.index_cast %c6_i32 : i32 to index
    %c0_122 = arith.constant 0 : index
    %c0_123 = arith.constant 0 : index
    %411 = vector.load %arg6[%410, %c0_122, %c0_123] : memref<8x2x32xbf16, #tpu.memory_space<vmem>>, vector<1x2x32xbf16>
    %412 = vector.shape_cast %411 : vector<1x2x32xbf16> to vector<2x32xbf16>
    %413 = vector.shape_cast %409 : vector<2x32xbf16> to vector<1x2x32xbf16>
    tpu.vector_store %arg6[%410, %c0_122, %c0_123], %413 {strides = array<i32>} : memref<8x2x32xbf16, #tpu.memory_space<vmem>>, vector<1x2x32xbf16>,
    %414 = arith.truncf %408 : vector<2x32xf32> to vector<2x32xbf16>
    %415 = arith.index_cast %364 : i32 to index
    %c0_124 = arith.constant 0 : index
    %c0_125 = arith.constant 0 : index
    %416 = vector.load %arg7[%415, %c0_124, %c0_125] : memref<8x2x32xbf16, #tpu.memory_space<vmem>>, vector<1x2x32xbf16>
    %417 = vector.shape_cast %416 : vector<1x2x32xbf16> to vector<2x32xbf16>
    %418 = vector.shape_cast %414 : vector<2x32xbf16> to vector<1x2x32xbf16>
    tpu.vector_store %arg7[%415, %c0_124, %c0_125], %418 {strides = array<i32>} : memref<8x2x32xbf16, #tpu.memory_space<vmem>>, vector<1x2x32xbf16>,
    %c7_i32_126 = arith.constant 7 : i32
    %c7_i32_127 = arith.constant 7 : i32
    %419 = arith.subi %c7_i32_127, %c7_i32_126 : i32
    %c2_i32_128 = arith.constant 2 : i32
    %420 = arith.muli %c7_i32_126, %c2_i32_128 : i32
    %421 = arith.index_cast %420 : i32 to index
    %c0_129 = arith.constant 0 : index
    %422 = vector.load %arg8[%421, %c0_129] : memref<16x128xf32, #tpu.memory_space<vmem>>, vector<2x128xf32>
    %423 = arith.truncf %392 : vector<2x32xf32> to vector<2x32xbf16>
    %cst_130 = arith.constant dense<0.000000e+00> : vector<2x128xf32>
    %424 = tpu.matmul %423, %4, %cst_130 {dimension_numbers = #tpu.dot_dimension_numbers<[1], [0], [0], [1], [0, 0, 1, 1], [], []>} : vector<2x32xbf16>, vector<32x128xbf16>, vector<2x128xf32> -> vector<2x128xf32>
    %425 = arith.addf %422, %424 : vector<2x128xf32>
    %c2_i32_131 = arith.constant 2 : i32
    %426 = arith.muli %419, %c2_i32_131 : i32
    %427 = arith.index_cast %426 : i32 to index
    %c0_132 = arith.constant 0 : index
    %428 = vector.load %arg9[%427, %c0_132] : memref<16x128xf32, #tpu.memory_space<vmem>>, vector<2x128xf32>
    %429 = arith.truncf %408 : vector<2x32xf32> to vector<2x32xbf16>
    %cst_133 = arith.constant dense<0.000000e+00> : vector<2x128xf32>
    %430 = tpu.matmul %429, %6, %cst_133 {dimension_numbers = #tpu.dot_dimension_numbers<[1], [0], [0], [1], [0, 0, 1, 1], [], []>} : vector<2x32xbf16>, vector<32x128xbf16>, vector<2x128xf32> -> vector<2x128xf32>
    %431 = arith.addf %428, %430 : vector<2x128xf32>
    %432 = vector.extract_strided_slice %425 {offsets = [0, 0], sizes = [2, 96], strides = [1, 1]} : vector<2x128xf32> to vector<2x96xf32>
    %433 = arith.negf %432 : vector<2x96xf32>
    %434 = math.exp %433 : vector<2x96xf32>
    %cst_134 = arith.constant 1.000000e+00 : f32
    %435 = vector.broadcast %cst_134 : f32 to vector<2x96xf32>
    %436 = arith.addf %435, %434 : vector<2x96xf32>
    %437 = arith.divf %435, %436 : vector<2x96xf32>
    %438 = vector.extract_strided_slice %425 {offsets = [0, 96], sizes = [2, 32], strides = [1, 1]} : vector<2x128xf32> to vector<2x32xf32>
    %439 = math.tanh %438 : vector<2x32xf32>
    %440 = vector.extract_strided_slice %437 {offsets = [0, 32], sizes = [2, 32], strides = [1, 1]} : vector<2x96xf32> to vector<2x32xf32>
    %441 = arith.mulf %440, %389 : vector<2x32xf32>
    %442 = vector.extract_strided_slice %437 {offsets = [0, 0], sizes = [2, 32], strides = [1, 1]} : vector<2x96xf32> to vector<2x32xf32>
    %443 = arith.mulf %442, %439 : vector<2x32xf32>
    %444 = arith.addf %441, %443 : vector<2x32xf32>
    %445 = vector.extract_strided_slice %437 {offsets = [0, 64], sizes = [2, 32], strides = [1, 1]} : vector<2x96xf32> to vector<2x32xf32>
    %446 = math.tanh %444 : vector<2x32xf32>
    %447 = arith.mulf %445, %446 : vector<2x32xf32>
    %448 = vector.extract_strided_slice %431 {offsets = [0, 0], sizes = [2, 96], strides = [1, 1]} : vector<2x128xf32> to vector<2x96xf32>
    %449 = arith.negf %448 : vector<2x96xf32>
    %450 = math.exp %449 : vector<2x96xf32>
    %cst_135 = arith.constant 1.000000e+00 : f32
    %451 = vector.broadcast %cst_135 : f32 to vector<2x96xf32>
    %452 = arith.addf %451, %450 : vector<2x96xf32>
    %453 = arith.divf %451, %452 : vector<2x96xf32>
    %454 = vector.extract_strided_slice %431 {offsets = [0, 96], sizes = [2, 32], strides = [1, 1]} : vector<2x128xf32> to vector<2x32xf32>
    %455 = math.tanh %454 : vector<2x32xf32>
    %456 = vector.extract_strided_slice %453 {offsets = [0, 32], sizes = [2, 32], strides = [1, 1]} : vector<2x96xf32> to vector<2x32xf32>
    %457 = arith.mulf %456, %405 : vector<2x32xf32>
    %458 = vector.extract_strided_slice %453 {offsets = [0, 0], sizes = [2, 32], strides = [1, 1]} : vector<2x96xf32> to vector<2x32xf32>
    %459 = arith.mulf %458, %455 : vector<2x32xf32>
    %460 = arith.addf %457, %459 : vector<2x32xf32>
    %461 = vector.extract_strided_slice %453 {offsets = [0, 64], sizes = [2, 32], strides = [1, 1]} : vector<2x96xf32> to vector<2x32xf32>
    %462 = math.tanh %460 : vector<2x32xf32>
    %463 = arith.mulf %461, %462 : vector<2x32xf32>
    %464 = arith.truncf %447 : vector<2x32xf32> to vector<2x32xbf16>
    %465 = arith.index_cast %c7_i32_126 : i32 to index
    %c0_136 = arith.constant 0 : index
    %c0_137 = arith.constant 0 : index
    %466 = vector.load %arg6[%465, %c0_136, %c0_137] : memref<8x2x32xbf16, #tpu.memory_space<vmem>>, vector<1x2x32xbf16>
    %467 = vector.shape_cast %466 : vector<1x2x32xbf16> to vector<2x32xbf16>
    %468 = vector.shape_cast %464 : vector<2x32xbf16> to vector<1x2x32xbf16>
    tpu.vector_store %arg6[%465, %c0_136, %c0_137], %468 {strides = array<i32>} : memref<8x2x32xbf16, #tpu.memory_space<vmem>>, vector<1x2x32xbf16>,
    %469 = arith.truncf %463 : vector<2x32xf32> to vector<2x32xbf16>
    %470 = arith.index_cast %419 : i32 to index
    %c0_138 = arith.constant 0 : index
    %c0_139 = arith.constant 0 : index
    %471 = vector.load %arg7[%470, %c0_138, %c0_139] : memref<8x2x32xbf16, #tpu.memory_space<vmem>>, vector<1x2x32xbf16>
    %472 = vector.shape_cast %471 : vector<1x2x32xbf16> to vector<2x32xbf16>
    %473 = vector.shape_cast %469 : vector<2x32xbf16> to vector<1x2x32xbf16>
    tpu.vector_store %arg7[%470, %c0_138, %c0_139], %473 {strides = array<i32>} : memref<8x2x32xbf16, #tpu.memory_space<vmem>>, vector<1x2x32xbf16>,
    %c8_i32 = arith.constant 8 : i32
    %c0_140 = arith.constant 0 : index
    %c0_141 = arith.constant 0 : index
    %c0_142 = arith.constant 0 : index
    %474 = vector.load %arg10[%c0_140, %c0_141, %c0_142] : memref<2x2x32xf32, #tpu.memory_space<vmem>>, vector<1x2x32xf32>
    %475 = vector.shape_cast %474 : vector<1x2x32xf32> to vector<2x32xf32>
    %476 = vector.shape_cast %447 : vector<2x32xf32> to vector<1x2x32xf32>
    tpu.vector_store %arg10[%c0_140, %c0_141, %c0_142], %476 {strides = array<i32>} : memref<2x2x32xf32, #tpu.memory_space<vmem>>, vector<1x2x32xf32>,
    %c0_143 = arith.constant 0 : index
    %c0_144 = arith.constant 0 : index
    %c0_145 = arith.constant 0 : index
    %477 = vector.load %arg11[%c0_143, %c0_144, %c0_145] : memref<2x2x32xf32, #tpu.memory_space<vmem>>, vector<1x2x32xf32>
    %478 = vector.shape_cast %477 : vector<1x2x32xf32> to vector<2x32xf32>
    %479 = vector.shape_cast %444 : vector<2x32xf32> to vector<1x2x32xf32>
    tpu.vector_store %arg11[%c0_143, %c0_144, %c0_145], %479 {strides = array<i32>} : memref<2x2x32xf32, #tpu.memory_space<vmem>>, vector<1x2x32xf32>,
    %c1_146 = arith.constant 1 : index
    %c0_147 = arith.constant 0 : index
    %c0_148 = arith.constant 0 : index
    %480 = vector.load %arg10[%c1_146, %c0_147, %c0_148] : memref<2x2x32xf32, #tpu.memory_space<vmem>>, vector<1x2x32xf32>
    %481 = vector.shape_cast %480 : vector<1x2x32xf32> to vector<2x32xf32>
    %482 = vector.shape_cast %463 : vector<2x32xf32> to vector<1x2x32xf32>
    tpu.vector_store %arg10[%c1_146, %c0_147, %c0_148], %482 {strides = array<i32>} : memref<2x2x32xf32, #tpu.memory_space<vmem>>, vector<1x2x32xf32>,
    %c1_149 = arith.constant 1 : index
    %c0_150 = arith.constant 0 : index
    %c0_151 = arith.constant 0 : index
    %483 = vector.load %arg11[%c1_149, %c0_150, %c0_151] : memref<2x2x32xf32, #tpu.memory_space<vmem>>, vector<1x2x32xf32>
    %484 = vector.shape_cast %483 : vector<1x2x32xf32> to vector<2x32xf32>
    %485 = vector.shape_cast %460 : vector<2x32xf32> to vector<1x2x32xf32>
    tpu.vector_store %arg11[%c1_149, %c0_150, %c0_151], %485 {strides = array<i32>} : memref<2x2x32xf32, #tpu.memory_space<vmem>>, vector<1x2x32xf32>,
    return
  }
  func.func @transform_0(%arg0: i32) -> (i32, i32) {
    %c0_i32 = arith.constant 0 : i32
    %c0_i32_0 = arith.constant 0 : i32
    return %arg0, %c0_i32 : i32, i32
  }
  func.func @transform_1(%arg0: i32) -> (i32, i32) {
    %c0_i32 = arith.constant 0 : i32
    %0 = arith.subi %c0_i32, %arg0 : i32
    %c0_i32_0 = arith.constant 0 : i32
    %c0_i32_1 = arith.constant 0 : i32
    return %0, %c0_i32_0 : i32, i32
  }
  func.func @transform_2(%arg0: i32) -> (i32, i32, i32) {
    %c0_i32 = arith.constant 0 : i32
    %c0_i32_0 = arith.constant 0 : i32
    %c0_i32_1 = arith.constant 0 : i32
    %c0_i32_2 = arith.constant 0 : i32
    return %c0_i32, %c0_i32_0, %c0_i32_1 : i32, i32, i32
  }
  func.func @transform_3(%arg0: i32) -> (i32, i32, i32) {
    %c0_i32 = arith.constant 0 : i32
    %c0_i32_0 = arith.constant 0 : i32
    %c0_i32_1 = arith.constant 0 : i32
    %c0_i32_2 = arith.constant 0 : i32
    return %c0_i32, %c0_i32_0, %c0_i32_1 : i32, i32, i32
  }
  func.func @transform_4(%arg0: i32) -> (i32, i32, i32) {
    %c0_i32 = arith.constant 0 : i32
    %c0_i32_0 = arith.constant 0 : i32
    %c0_i32_1 = arith.constant 0 : i32
    %c0_i32_2 = arith.constant 0 : i32
    return %c0_i32, %c0_i32_0, %c0_i32_1 : i32, i32, i32
  }
  func.func @transform_5(%arg0: i32) -> (i32, i32, i32) {
    %c0_i32 = arith.constant 0 : i32
    %c0_i32_0 = arith.constant 0 : i32
    %c0_i32_1 = arith.constant 0 : i32
    return %arg0, %c0_i32, %c0_i32_0 : i32, i32, i32
  }
  func.func @transform_6(%arg0: i32) -> (i32, i32, i32) {
    %c0_i32 = arith.constant 0 : i32
    %0 = arith.subi %c0_i32, %arg0 : i32
    %c0_i32_0 = arith.constant 0 : i32
    %c0_i32_1 = arith.constant 0 : i32
    %c0_i32_2 = arith.constant 0 : i32
    return %0, %c0_i32_0, %c0_i32_1 : i32, i32, i32
  }
}

</mosaic_0001>

<llo_original>
// kernel: tpu_custom_call.1
$region0: #{tpu_custom_call.1}
  #allocation0 [shape = 'u32[]', space=smem, size = 0x4, offset = 0x4, fixed_abs, tag = 'smem constant byte address 0x4 - core index']
  #allocation1 [shape = 'u32[144,128]{1,0:T(1,128)}', space=vmem, size = 0x12000, scoped, tag = 'internal scratch']
  #allocation2 [shape = 'f32[16,128]{1,0:T(8,128)}', space=vmem, size = 0x2000, scoped, tag = 'scratch operand']
  #allocation3 [shape = 'f32[16,128]{1,0:T(8,128)}', space=vmem, size = 0x2000, scoped, tag = 'scratch operand']
  #allocation4 [shape = 'f32[2,2,32]{2,1,0:T(2,128)}', space=vmem, size = 0x800, scoped, tag = 'scratch operand']
  #allocation5 [shape = 'f32[2,2,32]{2,1,0:T(2,128)}', space=vmem, size = 0x800, scoped, tag = 'scratch operand']
  %s0 = inlined_call_operand.hbm [shape: bf16[16,32], index: 0, kind: input, shape index: {}]
  %s1 = inlined_call_operand.hbm [shape: bf16[16,32], index: 1, kind: input, shape index: {}]
  %s2 = inlined_call_operand.hbm [shape: bf16[2,32,128], index: 2, kind: input, shape index: {}]
  %s3 = inlined_call_operand.hbm [shape: bf16[2,32,128], index: 3, kind: input, shape index: {}]
  %s4 = inlined_call_operand.vmem [shape: f32[2,1,128], index: 4, kind: input, shape index: {}]
  %s5 = inlined_call_operand.hbm [shape: bf16[8,2,32], index: 5, kind: output, shape index: {0}]
  %s6 = inlined_call_operand.hbm [shape: bf16[8,2,32], index: 6, kind: output, shape index: {1}]
  %7 = xla_tuple %s5, %s6
  %s8 = sld [smem:[#allocation0]]
  $region58: #{tpu_custom_call.1} parent=0
    _
  %s10 = ssub.s32 1, %s8
  %s11 = scalar_select 0, %s10, %s8
  $region1: #{tpu_custom_call.1} parent=0
    #allocation6 [shape = 'u8[4096]{0}', space=vmem, size = 0x1000, scoped, tag = 'input window, operand 0, single buffered']
    #allocation7 [shape = 's32[1]{0}', space=sflag, size = 0x4, scoped, tag = 'scoped memory for tpu_custom_call.1']
    #allocation8 [shape = 's32[1]{0}', space=sflag, size = 0x4, scoped, tag = 'scoped memory for tpu_custom_call.1']
    #allocation9 [shape = 'u8[4096]{0}', space=vmem, size = 0x1000, scoped, tag = 'input window, operand 1, single buffered']
    #allocation10 [shape = 's32[1]{0}', space=sflag, size = 0x4, scoped, tag = 'scoped memory for tpu_custom_call.1']
    #allocation11 [shape = 'u8[16384]{0}', space=vmem, size = 0x4000, scoped, tag = 'input window, operand 2, single buffered']
    #allocation12 [shape = 'u8[16384]{0}', space=vmem, size = 0x4000, scoped, tag = 'input window, operand 3, single buffered']
    #allocation13 [shape = 's32[1]{0}', space=sflag, size = 0x4, scoped, tag = 'scoped memory for tpu_custom_call.1']
    #allocation14 [shape = 'u8[4096]{0}', space=vmem, size = 0x1000, scoped, tag = 'output window, operand 0, single buffered']
    #allocation15 [shape = 'u8[4096]{0}', space=vmem, size = 0x1000, scoped, tag = 'output window, operand 1, single buffered']
    #allocation16 [shape = 's32[1]{0}', space=sflag, size = 0x4, scoped, tag = 'scoped memory for tpu_custom_call.1']
    %12 = vsyncpa [#allocation7], 0
    %13 = vsyncpa [#allocation10], 0
    %14 = vsyncpa [#allocation13], 0
    %15 = vsyncpa [#allocation8], 0
    %16 = vsyncpa [#allocation16], 0
    // Predicated region
    $region2: #{tpu_custom_call.1} parent=1 // pred_check
      _
    $region3: #{tpu_custom_call.1} parent=1 // pred_check_branch
      %18 = sbr.rel (0) target = $region5
    $region4: #{tpu_custom_call.1} parent=1 // pred_region
      %s20 = ssub.s32 128, 128
      %21 = vsyncadd [#allocation7], %s20
      %s22 = sshll.u32 [#allocation6], 4
      %s23 = int_to_ptr.vmem [resolvable:$true] %s22
      %28 = dma.hbm_to_vmem [thread:$0]  %s0, 128, %s23, [#allocation7], 64, 64, 4
    $region5: #{tpu_custom_call.1} parent=1 // pred_fallthru
      _
    // Predicated region
    $region6: #{tpu_custom_call.1} parent=1 // pred_check
      _
    $region7: #{tpu_custom_call.1} parent=1 // pred_check_branch
      %30 = sbr.rel (0) target = $region9
    $region8: #{tpu_custom_call.1} parent=1 // pred_region
      %s31 = ssub.s32 0, 0
      %s32 = smul.u32 2, %s31
      %s34 = ssub.s32 128, 128
      %35 = vsyncadd [#allocation10], %s34
      %s36 = smul.addr %s32, 64
      %s37 = scalar_lea.hbm %s1, %s36
      %s38 = sshll.u32 [#allocation9], 4
      %s39 = int_to_ptr.vmem [resolvable:$true] %s38
      %44 = dma.hbm_to_vmem [thread:$0]  %s37, 128, %s39, [#allocation10], 64, 64, 4
    $region9: #{tpu_custom_call.1} parent=1 // pred_fallthru
      _
    // Predicated region
    $region10: #{tpu_custom_call.1} parent=1 // pred_check
      _
    $region11: #{tpu_custom_call.1} parent=1 // pred_check_branch
      %46 = sbr.rel (0) target = $region13
    $region12: #{tpu_custom_call.1} parent=1 // pred_region
      %s48 = ssub.s32 512, 512
      %49 = vsyncadd [#allocation10], %s48
      %s50 = sshll.u32 [#allocation11], 4
      %s51 = int_to_ptr.vmem [resolvable:$true] %s50
      %56 = dma.hbm_to_vmem [thread:$0]  %s2, 512, %s51, [#allocation10], 64, 64, 4
    $region13: #{tpu_custom_call.1} parent=1 // pred_fallthru
      _
    // Predicated region
    $region14: #{tpu_custom_call.1} parent=1 // pred_check
      _
    $region15: #{tpu_custom_call.1} parent=1 // pred_check_branch
      %58 = sbr.rel (0) target = $region17
    $region16: #{tpu_custom_call.1} parent=1 // pred_region
      %s60 = ssub.s32 512, 512
      %61 = vsyncadd [#allocation13], %s60
      %s62 = sshll.u32 [#allocation12], 4
      %s63 = int_to_ptr.vmem [resolvable:$true] %s62
      %68 = dma.hbm_to_vmem [thread:$0]  %s3, 512, %s63, [#allocation13], 64, 64, 4
    $region17: #{tpu_custom_call.1} parent=1 // pred_fallthru
      _
    // Predicated region
    $region18: #{tpu_custom_call.1} parent=1 // pred_check
      _
    $region19: #{tpu_custom_call.1} parent=1 // pred_check_branch
      %70 = sbr.rel (0) target = $region21
    $region20: #{tpu_custom_call.1} parent=1 // pred_region
      _
    $region21: #{tpu_custom_call.1} parent=1 // pred_fallthru
      _
    // Predicated region
    $region22: #{tpu_custom_call.1} parent=1 // pred_check
      _
    $region23: #{tpu_custom_call.1} parent=1 // pred_check_branch
      %72 = sbr.rel (0) target = $region25
    $region24: #{tpu_custom_call.1} parent=1 // pred_region
      %73 = dma.done [#allocation7], 128
    $region25: #{tpu_custom_call.1} parent=1 // pred_fallthru
      _
    // Predicated region
    $region26: #{tpu_custom_call.1} parent=1 // pred_check
      _
    $region27: #{tpu_custom_call.1} parent=1 // pred_check_branch
      %75 = sbr.rel (0) target = $region29
    $region28: #{tpu_custom_call.1} parent=1 // pred_region
      %76 = dma.done [#allocation10], 128
    $region29: #{tpu_custom_call.1} parent=1 // pred_fallthru
      _
    // Predicated region
    $region30: #{tpu_custom_call.1} parent=1 // pred_check
      _
    $region31: #{tpu_custom_call.1} parent=1 // pred_check_branch
      %78 = sbr.rel (0) target = $region33
    $region32: #{tpu_custom_call.1} parent=1 // pred_region
      %79 = dma.done [#allocation10], 512
    $region33: #{tpu_custom_call.1} parent=1 // pred_fallthru
      _
    // Predicated region
    $region34: #{tpu_custom_call.1} parent=1 // pred_check
      _
    $region35: #{tpu_custom_call.1} parent=1 // pred_check_branch
      %81 = sbr.rel (0) target = $region37
    $region36: #{tpu_custom_call.1} parent=1 // pred_region
      %82 = dma.done [#allocation13], 512
    $region37: #{tpu_custom_call.1} parent=1 // pred_fallthru
      _
    %s83 = ssub.s32 0, 0
    %s84 = smul.u32 2, %s83
    %s85 = ssub.s32 0, 0
    %s86 = smul.u32 8, %s85
    %p88 = scmp.eq.s32.totalorder 0, 0
    // Predicated region
    $region38: #{tpu_custom_call.1} parent=1 // pred_check
      %p89 = pneg %p88
    $region39: #{tpu_custom_call.1} parent=1 // pred_check_branch
      %91 = sbr.rel (%p89) target = $region41
    $region40: #{tpu_custom_call.1} parent=1 // pred_region
      %vm92 = vcmask 254976
      %93 = vst.msk [vmem:[#allocation4] sm:$0x3] %vm92, 0.0
      %94 = vst.msk [vmem:[#allocation4 + $0x2] sm:$0x3] %vm92, 0.0
      %95 = vst.msk [vmem:[#allocation5] sm:$0x3] %vm92, 0.0
      %96 = vst.msk [vmem:[#allocation5 + $0x2] sm:$0x3] %vm92, 0.0
    $region41: #{tpu_custom_call.1} parent=1 // pred_fallthru
      _
    %v97 = vld [vmem:[#allocation12] sm:$0xf]
    %v98 = vld [vmem:[#allocation12 + $0x4] sm:$0xf]
    %v99 = vld [vmem:[#allocation12 + $0x8] sm:$0xf]
    %v100 = vld [vmem:[#allocation12 + $0xc] sm:$0xf]
    %s101 = scalar_lea.vmem [#allocation12], 16
    %v102 = vld [vmem:[%s101] sm:$0xf]
    %v103 = vld [vmem:[%s101 + $0x4] sm:$0xf]
    %v104 = vld [vmem:[%s101 + $0x8] sm:$0xf]
    %v105 = vld [vmem:[%s101 + $0xc] sm:$0xf]
    %v106 = vld [vmem:[%s4] sm:$0x1]
    %v107 = vld [vmem:[%s4 + $0x1] sm:$0x1]
    %v108 = vld [vmem:[#allocation6] sm:$0xf]
    %v109 = vld [vmem:[#allocation6 + $0x4] sm:$0xf]
    %v110 = vld [vmem:[#allocation11] sm:$0xf]
    %v111 = vld [vmem:[#allocation11 + $0x4] sm:$0xf]
    %v112 = vld [vmem:[#allocation11 + $0x8] sm:$0xf]
    %v113 = vld [vmem:[#allocation11 + $0xc] sm:$0xf]
    %v114 = vld [vmem:[#allocation9] sm:$0xf]
    %v115 = vld [vmem:[#allocation9 + $0x4] sm:$0xf]
    %s116 = scalar_lea.vmem [#allocation11], 16
    %v117 = vld [vmem:[%s116] sm:$0xf]
    %v118 = vld [vmem:[%s116 + $0x4] sm:$0xf]
    %v119 = vld [vmem:[%s116 + $0x8] sm:$0xf]
    %v120 = vld [vmem:[%s116 + $0xc] sm:$0xf]
    %v122 = vlaneseq
    %v123 = vshrl.u32 %v122, 7
    %v124 = vsub.s32 0, %v123
    %v125 = vrot.slane %v106, %v124
    %v129 = vunpack.c.l.b16 %v108
    %v130 = vunpack.c.l.b16 %v109
    %v131 = vpack.c.b16 %v130, %v129
    %v136 = vunpack.c.l.b16 %v110
    %v137 = vunpack.c.l.b16 %v111
    %v138 = vunpack.c.l.b16 %v112
    %v139 = vunpack.c.l.b16 %v113
    %v140 = vpack.c.b16 %v137, %v136
    %v141 = vpack.c.b16 %v139, %v138
    %vm144 = vcmask 261120
    %v146 = vsel %vm144, %v131, 0
    %148 = vmatprep.subr.bf16.mxu0 0
    %149 = vmatpush1.bf16.msra.mxu0 %v140
    %150 = vmatprep.subr.bf16.mxu0 0
    %151 = vmatpush1.bf16.msra.mxu0 %v141
    %152 = vmatprep.subr.bf16.mxu0 0
    %153 = vmatpush1.bf16.msra.mxu0 0
    %154 = vmatprep.subr.bf16.mxu0 0
    %155 = vmatpush1.bf16.msra.mxu0 0
    %156 = vmatprep.subr.bf16.mxu0 0
    %157 = vmatpush1.bf16.msra.mxu0 0
    %158 = vmatprep.subr.bf16.mxu0 0
    %159 = vmatpush1.bf16.msra.mxu0 0
    %160 = vmatprep.subr.bf16.mxu0 0
    %161 = vmatpush1.bf16.msra.mxu0 0
    %162 = vmatprep.subr.bf16.mxu0 0
    %163 = vmatpush1.bf16.msra.mxu0 0
    %164 = vmatprep.subr.bf16.mxu0 0
    %165 = vmatpush1.bf16.msra.mxu0 0
    %166 = vmatprep.subr.bf16.mxu0 0
    %167 = vmatpush1.bf16.msra.mxu0 0
    %168 = vmatprep.subr.bf16.mxu0 0
    %169 = vmatpush1.bf16.msra.mxu0 0
    %170 = vmatprep.subr.bf16.mxu0 0
    %171 = vmatpush1.bf16.msra.mxu0 0
    %172 = vmatprep.subr.bf16.mxu0 0
    %173 = vmatpush1.bf16.msra.mxu0 0
    %174 = vmatprep.subr.bf16.mxu0 0
    %175 = vmatpush1.bf16.msra.mxu0 0
    %176 = vmatprep.subr.bf16.mxu0 0
    %177 = vmatpush1.bf16.msra.mxu0 0
    %178 = vmatprep.subr.bf16.mxu0 0
    %179 = vmatpush1.bf16.msra.mxu0 0
    %180 = vmatprep.mubr.bf16.mxu0 0
    %181 = vmatmul.mubr.bf16.gmra.mrb[0].mxu0 %v146
    %v182 = vpop.f32.mrb[0].mxu0
    %v183 = vadd.f32 %v125, %v182
    %v184 = vpop.f32.mrb[0].mxu0
    %v185 = vpop.f32.mrb[0].mxu0
    %v186 = vadd.f32 %v125, %v185
    %v187 = vpop.f32.mrb[0].mxu0
    %188 = vdwg.mxu0
    %189 = vst [vmem:[#allocation2] sm:$0xff] %v183
    %190 = vst [vmem:[#allocation2 + $0x8] sm:$0xff] %v186
    %v192 = vlaneseq
    %v193 = vshrl.u32 %v192, 7
    %v194 = vsub.s32 0, %v193
    %v195 = vrot.slane %v107, %v194
    %v199 = vunpack.c.l.b16 %v114
    %v200 = vunpack.c.l.b16 %v115
    %v201 = vpack.c.b16 %v200, %v199
    %v206 = vunpack.c.l.b16 %v117
    %v207 = vunpack.c.l.b16 %v118
    %v208 = vunpack.c.l.b16 %v119
    %v209 = vunpack.c.l.b16 %v120
    %v210 = vpack.c.b16 %v207, %v206
    %v211 = vpack.c.b16 %v209, %v208
    %v215 = vsel %vm144, %v201, 0
    %217 = vmatprep.subr.bf16.mxu0 0
    %218 = vmatpush1.bf16.msra.mxu0 %v210
    %219 = vmatprep.subr.bf16.mxu0 0
    %220 = vmatpush1.bf16.msra.mxu0 %v211
    %221 = vmatprep.subr.bf16.mxu0 0
    %222 = vmatpush1.bf16.msra.mxu0 0
    %223 = vmatprep.subr.bf16.mxu0 0
    %224 = vmatpush1.bf16.msra.mxu0 0
    %225 = vmatprep.subr.bf16.mxu0 0
    %226 = vmatpush1.bf16.msra.mxu0 0
    %227 = vmatprep.subr.bf16.mxu0 0
    %228 = vmatpush1.bf16.msra.mxu0 0
    %229 = vmatprep.subr.bf16.mxu0 0
    %230 = vmatpush1.bf16.msra.mxu0 0
    %231 = vmatprep.subr.bf16.mxu0 0
    %232 = vmatpush1.bf16.msra.mxu0 0
    %233 = vmatprep.subr.bf16.mxu0 0
    %234 = vmatpush1.bf16.msra.mxu0 0
    %235 = vmatprep.subr.bf16.mxu0 0
    %236 = vmatpush1.bf16.msra.mxu0 0
    %237 = vmatprep.subr.bf16.mxu0 0
    %238 = vmatpush1.bf16.msra.mxu0 0
    %239 = vmatprep.subr.bf16.mxu0 0
    %240 = vmatpush1.bf16.msra.mxu0 0
    %241 = vmatprep.subr.bf16.mxu0 0
    %242 = vmatpush1.bf16.msra.mxu0 0
    %243 = vmatprep.subr.bf16.mxu0 0
    %244 = vmatpush1.bf16.msra.mxu0 0
    %245 = vmatprep.subr.bf16.mxu0 0
    %246 = vmatpush1.bf16.msra.mxu0 0
    %247 = vmatprep.subr.bf16.mxu0 0
    %248 = vmatpush1.bf16.msra.mxu0 0
    %249 = vmatprep.mubr.bf16.mxu0 0
    %250 = vmatmul.mubr.bf16.gmra.mrb[0].mxu0 %v215
    %v251 = vpop.f32.mrb[0].mxu0
    %v252 = vadd.f32 %v195, %v251
    %v253 = vpop.f32.mrb[0].mxu0
    %v254 = vpop.f32.mrb[0].mxu0
    %v255 = vadd.f32 %v195, %v254
    %v256 = vpop.f32.mrb[0].mxu0
    %257 = vdwg.mxu0
    %258 = vst [vmem:[#allocation3] sm:$0xff] %v252
    %259 = vst [vmem:[#allocation3 + $0x8] sm:$0xff] %v255
    %v260 = vld [vmem:[#allocation4] sm:$0x3]
    %v261 = vld [vmem:[#allocation5] sm:$0x3]
    %s262 = scalar_lea.vmem [#allocation4], 2
    %v263 = vld [vmem:[%s262] sm:$0x3]
    %s264 = scalar_lea.vmem [#allocation5], 2
    %v265 = vld [vmem:[%s264] sm:$0x3]
    %v266 = vld [vmem:[#allocation2] sm:$0x3]
    %v267 = vpack.c.bf16 %v260, %v260
    %v272 = vunpack.c.l.b16 %v97
    %v273 = vunpack.c.l.b16 %v98
    %v274 = vunpack.c.l.b16 %v99
    %v275 = vunpack.c.l.b16 %v100
    %v276 = vpack.c.b16 %v273, %v272
    %v277 = vpack.c.b16 %v275, %v274
    %v281 = vsel %vm144, %v267, 0
    %283 = vmatprep.subr.bf16.mxu0 0
    %284 = vmatpush1.bf16.msra.mxu0 %v276
    %285 = vmatprep.subr.bf16.mxu0 0
    %286 = vmatpush1.bf16.msra.mxu0 %v277
    %287 = vmatprep.subr.bf16.mxu0 0
    %288 = vmatpush1.bf16.msra.mxu0 0
    %289 = vmatprep.subr.bf16.mxu0 0
    %290 = vmatpush1.bf16.msra.mxu0 0
    %291 = vmatprep.subr.bf16.mxu0 0
    %292 = vmatpush1.bf16.msra.mxu0 0
    %293 = vmatprep.subr.bf16.mxu0 0
    %294 = vmatpush1.bf16.msra.mxu0 0
    %295 = vmatprep.subr.bf16.mxu0 0
    %296 = vmatpush1.bf16.msra.mxu0 0
    %297 = vmatprep.subr.bf16.mxu0 0
    %298 = vmatpush1.bf16.msra.mxu0 0
    %299 = vmatprep.subr.bf16.mxu0 0
    %300 = vmatpush1.bf16.msra.mxu0 0
    %301 = vmatprep.subr.bf16.mxu0 0
    %302 = vmatpush1.bf16.msra.mxu0 0
    %303 = vmatprep.subr.bf16.mxu0 0
    %304 = vmatpush1.bf16.msra.mxu0 0
    %305 = vmatprep.subr.bf16.mxu0 0
    %306 = vmatpush1.bf16.msra.mxu0 0
    %307 = vmatprep.subr.bf16.mxu0 0
    %308 = vmatpush1.bf16.msra.mxu0 0
    %309 = vmatprep.subr.bf16.mxu0 0
    %310 = vmatpush1.bf16.msra.mxu0 0
    %311 = vmatprep.subr.bf16.mxu0 0
    %312 = vmatpush1.bf16.msra.mxu0 0
    %313 = vmatprep.subr.bf16.mxu0 0
    %314 = vmatpush1.bf16.msra.mxu0 0
    %315 = vmatprep.mubr.bf16.mxu0 0
    %316 = vmatmul.mubr.bf16.gmra.mrb[0].mxu0 %v281
    %v317 = vpop.f32.mrb[0].mxu0
    %v318 = vadd.f32 0.0, %v317
    %v319 = vpop.f32.mrb[0].mxu0
    %v320 = vpop.f32.mrb[0].mxu0
    %v321 = vpop.f32.mrb[0].mxu0
    %322 = vdwg.mxu0
    %v323 = vadd.f32 %v266, %v318
    %v324 = vld [vmem:[#allocation3 + $0xe] sm:$0x3]
    %v325 = vpack.c.bf16 %v263, %v263
    %v330 = vunpack.c.l.b16 %v102
    %v331 = vunpack.c.l.b16 %v103
    %v332 = vunpack.c.l.b16 %v104
    %v333 = vunpack.c.l.b16 %v105
    %v334 = vpack.c.b16 %v331, %v330
    %v335 = vpack.c.b16 %v333, %v332
    %v339 = vsel %vm144, %v325, 0
    %341 = vmatprep.subr.bf16.mxu0 0
    %342 = vmatpush1.bf16.msra.mxu0 %v334
    %343 = vmatprep.subr.bf16.mxu0 0
    %344 = vmatpush1.bf16.msra.mxu0 %v335
    %345 = vmatprep.subr.bf16.mxu0 0
    %346 = vmatpush1.bf16.msra.mxu0 0
    %347 = vmatprep.subr.bf16.mxu0 0
    %348 = vmatpush1.bf16.msra.mxu0 0
    %349 = vmatprep.subr.bf16.mxu0 0
    %350 = vmatpush1.bf16.msra.mxu0 0
    %351 = vmatprep.subr.bf16.mxu0 0
    %352 = vmatpush1.bf16.msra.mxu0 0
    %353 = vmatprep.subr.bf16.mxu0 0
    %354 = vmatpush1.bf16.msra.mxu0 0
    %355 = vmatprep.subr.bf16.mxu0 0
    %356 = vmatpush1.bf16.msra.mxu0 0
    %357 = vmatprep.subr.bf16.mxu0 0
    %358 = vmatpush1.bf16.msra.mxu0 0
    %359 = vmatprep.subr.bf16.mxu0 0
    %360 = vmatpush1.bf16.msra.mxu0 0
    %361 = vmatprep.subr.bf16.mxu0 0
    %362 = vmatpush1.bf16.msra.mxu0 0
    %363 = vmatprep.subr.bf16.mxu0 0
    %364 = vmatpush1.bf16.msra.mxu0 0
    %365 = vmatprep.subr.bf16.mxu0 0
    %366 = vmatpush1.bf16.msra.mxu0 0
    %367 = vmatprep.subr.bf16.mxu0 0
    %368 = vmatpush1.bf16.msra.mxu0 0
    %369 = vmatprep.subr.bf16.mxu0 0
    %370 = vmatpush1.bf16.msra.mxu0 0
    %371 = vmatprep.subr.bf16.mxu0 0
    %372 = vmatpush1.bf16.msra.mxu0 0
    %373 = vmatprep.mubr.bf16.mxu0 0
    %374 = vmatmul.mubr.bf16.gmra.mrb[0].mxu0 %v339
    %v375 = vpop.f32.mrb[0].mxu0
    %v376 = vadd.f32 0.0, %v375
    %v377 = vpop.f32.mrb[0].mxu0
    %v378 = vpop.f32.mrb[0].mxu0
    %v379 = vpop.f32.mrb[0].mxu0
    %380 = vdwg.mxu0
    %v381 = vadd.f32 %v324, %v376
    %v382 = vxor.u32 %v323, 2147483648
    %v383 = vmul.f32 %v382, 1.442695
    %v384 = vpow.pop %v383
    %v385 = vadd.f32 %v384, 1.0
    %v386 = vrcp.pop %v385
    %v387 = vmul.f32 1.0, %v386
    %v388 = vtanh.pop %v323
    %390 = vrot.lane.b32.xlu0 %v261, 32
    %v391 = vpop.permute.xlu0 %390
    %v393 = vmul.f32 %v387, %v391
    %395 = vrot.lane.b32.xlu0 %v388, 32
    %v396 = vpop.permute.xlu0 %395
    %v398 = vmul.f32 %v387, %v396
    %400 = vrot.lane.b32.xlu0 %v398, 32
    %v401 = vpop.permute.xlu0 %400
    %v403 = vadd.f32 %v393, %v401
    %v404 = vtanh.pop %v403
    %406 = vrot.lane.b32.xlu0 %v404, 32
    %v407 = vpop.permute.xlu0 %406
    %v409 = vmul.f32 %v387, %v407
    %v410 = vxor.u32 %v381, 2147483648
    %v411 = vmul.f32 %v410, 1.442695
    %v412 = vpow.pop %v411
    %v413 = vadd.f32 %v412, 1.0
    %v414 = vrcp.pop %v413
    %v415 = vmul.f32 1.0, %v414
    %v416 = vtanh.pop %v381
    %418 = vrot.lane.b32.xlu0 %v265, 32
    %v419 = vpop.permute.xlu0 %418
    %v421 = vmul.f32 %v415, %v419
    %423 = vrot.lane.b32.xlu0 %v416, 32
    %v424 = vpop.permute.xlu0 %423
    %v426 = vmul.f32 %v415, %v424
    %428 = vrot.lane.b32.xlu0 %v426, 32
    %v429 = vpop.permute.xlu0 %428
    %v431 = vadd.f32 %v421, %v429
    %v432 = vtanh.pop %v431
    %434 = vrot.lane.b32.xlu0 %v432, 32
    %v435 = vpop.permute.xlu0 %434
    %v437 = vmul.f32 %v415, %v435
    %v438 = vpack.c.bf16 %v409, %v409
    %v441 = vunpack.c.l.s4 1966171168
    %v442 = vunpack.c.0.s8 %v441
    %v443 = vlaneseq
    %v444 = vshrl.u32 %v443, 7
    %v445 = vsub.s32 %v442, %v444
    %v446 = vrot.slane %v438, %v445
    %v448 = vunpack.c.l.s4 1966171168
    %v449 = vunpack.c.0.s8 %v448
    %v450 = vlaneseq
    %v451 = vshrl.u32 %v450, 7
    %v452 = vsub.s32 %v449, %v451
    %v453 = vrot.slane %v446, %v452
    %454 = vrot.lane.b32.xlu0 %v453, 64
    %v455 = vpop.permute.xlu0 %454
    %vm457 = vcmask 253952
    %458 = vst.msk [vmem:[#allocation14] sm:$0x1] %vm457, %v455
    %v459 = vpack.c.bf16 %v437, %v437
    %v462 = vunpack.c.l.s4 1966171168
    %v463 = vunpack.c.0.s8 %v462
    %v464 = vlaneseq
    %v465 = vshrl.u32 %v464, 7
    %v466 = vsub.s32 %v463, %v465
    %v467 = vrot.slane %v459, %v466
    %v469 = vunpack.c.l.s4 1966171168
    %v470 = vunpack.c.0.s8 %v469
    %v471 = vlaneseq
    %v472 = vshrl.u32 %v471, 7
    %v473 = vsub.s32 %v470, %v472
    %v474 = vrot.slane %v467, %v473
    %475 = vrot.lane.b32.xlu0 %v474, 64
    %v476 = vpop.permute.xlu0 %475
    %s478 = scalar_lea.vmem [#allocation15], 7
    %479 = vst.msk [vmem:[%s478] sm:$0x1] %vm457, %v476
    %v480 = vld [vmem:[#allocation2 + $0x2] sm:$0x3]
    %481 = vrot.lane.b32.xlu0 %v438, 64
    %v482 = vpop.permute.xlu0 %481
    %v484 = vsel %vm144, %v482, 0
    %486 = vmatprep.subr.bf16.mxu0 0
    %487 = vmatpush1.bf16.msra.mxu0 %v276
    %488 = vmatprep.subr.bf16.mxu0 0
    %489 = vmatpush1.bf16.msra.mxu0 %v277
    %490 = vmatprep.subr.bf16.mxu0 0
    %491 = vmatpush1.bf16.msra.mxu0 0
    %492 = vmatprep.subr.bf16.mxu0 0
    %493 = vmatpush1.bf16.msra.mxu0 0
    %494 = vmatprep.subr.bf16.mxu0 0
    %495 = vmatpush1.bf16.msra.mxu0 0
    %496 = vmatprep.subr.bf16.mxu0 0
    %497 = vmatpush1.bf16.msra.mxu0 0
    %498 = vmatprep.subr.bf16.mxu0 0
    %499 = vmatpush1.bf16.msra.mxu0 0
    %500 = vmatprep.subr.bf16.mxu0 0
    %501 = vmatpush1.bf16.msra.mxu0 0
    %502 = vmatprep.subr.bf16.mxu0 0
    %503 = vmatpush1.bf16.msra.mxu0 0
    %504 = vmatprep.subr.bf16.mxu0 0
    %505 = vmatpush1.bf16.msra.mxu0 0
    %506 = vmatprep.subr.bf16.mxu0 0
    %507 = vmatpush1.bf16.msra.mxu0 0
    %508 = vmatprep.subr.bf16.mxu0 0
    %509 = vmatpush1.bf16.msra.mxu0 0
    %510 = vmatprep.subr.bf16.mxu0 0
    %511 = vmatpush1.bf16.msra.mxu0 0
    %512 = vmatprep.subr.bf16.mxu0 0
    %513 = vmatpush1.bf16.msra.mxu0 0
    %514 = vmatprep.subr.bf16.mxu0 0
    %515 = vmatpush1.bf16.msra.mxu0 0
    %516 = vmatprep.subr.bf16.mxu0 0
    %517 = vmatpush1.bf16.msra.mxu0 0
    %518 = vmatprep.mubr.bf16.mxu0 0
    %519 = vmatmul.mubr.bf16.gmra.mrb[0].mxu0 %v484
    %v520 = vpop.f32.mrb[0].mxu0
    %v521 = vadd.f32 0.0, %v520
    %v522 = vpop.f32.mrb[0].mxu0
    %v523 = vpop.f32.mrb[0].mxu0
    %v524 = vpop.f32.mrb[0].mxu0
    %525 = vdwg.mxu0
    %v526 = vadd.f32 %v480, %v521
    %v527 = vld [vmem:[#allocation3 + $0xc] sm:$0x3]
    %528 = vrot.lane.b32.xlu0 %v459, 64
    %v529 = vpop.permute.xlu0 %528
    %v531 = vsel %vm144, %v529, 0
    %533 = vmatprep.subr.bf16.mxu0 0
    %534 = vmatpush1.bf16.msra.mxu0 %v334
    %535 = vmatprep.subr.bf16.mxu0 0
    %536 = vmatpush1.bf16.msra.mxu0 %v335
    %537 = vmatprep.subr.bf16.mxu0 0
    %538 = vmatpush1.bf16.msra.mxu0 0
    %539 = vmatprep.subr.bf16.mxu0 0
    %540 = vmatpush1.bf16.msra.mxu0 0
    %541 = vmatprep.subr.bf16.mxu0 0
    %542 = vmatpush1.bf16.msra.mxu0 0
    %543 = vmatprep.subr.bf16.mxu0 0
    %544 = vmatpush1.bf16.msra.mxu0 0
    %545 = vmatprep.subr.bf16.mxu0 0
    %546 = vmatpush1.bf16.msra.mxu0 0
    %547 = vmatprep.subr.bf16.mxu0 0
    %548 = vmatpush1.bf16.msra.mxu0 0
    %549 = vmatprep.subr.bf16.mxu0 0
    %550 = vmatpush1.bf16.msra.mxu0 0
    %551 = vmatprep.subr.bf16.mxu0 0
    %552 = vmatpush1.bf16.msra.mxu0 0
    %553 = vmatprep.subr.bf16.mxu0 0
    %554 = vmatpush1.bf16.msra.mxu0 0
    %555 = vmatprep.subr.bf16.mxu0 0
    %556 = vmatpush1.bf16.msra.mxu0 0
    %557 = vmatprep.subr.bf16.mxu0 0
    %558 = vmatpush1.bf16.msra.mxu0 0
    %559 = vmatprep.subr.bf16.mxu0 0
    %560 = vmatpush1.bf16.msra.mxu0 0
    %561 = vmatprep.subr.bf16.mxu0 0
    %562 = vmatpush1.bf16.msra.mxu0 0
    %563 = vmatprep.subr.bf16.mxu0 0
    %564 = vmatpush1.bf16.msra.mxu0 0
    %565 = vmatprep.mubr.bf16.mxu0 0
    %566 = vmatmul.mubr.bf16.gmra.mrb[0].mxu0 %v531
    %v567 = vpop.f32.mrb[0].mxu0
    %v568 = vadd.f32 0.0, %v567
    %v569 = vpop.f32.mrb[0].mxu0
    %v570 = vpop.f32.mrb[0].mxu0
    %v571 = vpop.f32.mrb[0].mxu0
    %572 = vdwg.mxu0
    %v573 = vadd.f32 %v527, %v568
    %v574 = vxor.u32 %v526, 2147483648
    %v575 = vmul.f32 %v574, 1.442695
    %v576 = vpow.pop %v575
    %v577 = vadd.f32 %v576, 1.0
    %v578 = vrcp.pop %v577
    %v579 = vmul.f32 1.0, %v578
    %v580 = vtanh.pop %v526
    %v581 = vmul.f32 %v579, %v403
    %583 = vrot.lane.b32.xlu0 %v580, 32
    %v584 = vpop.permute.xlu0 %583
    %v586 = vmul.f32 %v579, %v584
    %588 = vrot.lane.b32.xlu0 %v586, 32
    %v589 = vpop.permute.xlu0 %588
    %v591 = vadd.f32 %v581, %v589
    %v592 = vtanh.pop %v591
    %594 = vrot.lane.b32.xlu0 %v592, 32
    %v595 = vpop.permute.xlu0 %594
    %v597 = vmul.f32 %v579, %v595
    %v598 = vxor.u32 %v573, 2147483648
    %v599 = vmul.f32 %v598, 1.442695
    %v600 = vpow.pop %v599
    %v601 = vadd.f32 %v600, 1.0
    %v602 = vrcp.pop %v601
    %v603 = vmul.f32 1.0, %v602
    %v604 = vtanh.pop %v573
    %v605 = vmul.f32 %v603, %v431
    %607 = vrot.lane.b32.xlu0 %v604, 32
    %v608 = vpop.permute.xlu0 %607
    %v610 = vmul.f32 %v603, %v608
    %612 = vrot.lane.b32.xlu0 %v610, 32
    %v613 = vpop.permute.xlu0 %612
    %v615 = vadd.f32 %v605, %v613
    %v616 = vtanh.pop %v615
    %618 = vrot.lane.b32.xlu0 %v616, 32
    %v619 = vpop.permute.xlu0 %618
    %v621 = vmul.f32 %v603, %v619
    %v622 = vpack.c.bf16 %v597, %v597
    %v625 = vunpack.c.l.s4 1966171168
    %v626 = vunpack.c.0.s8 %v625
    %v627 = vlaneseq
    %v628 = vshrl.u32 %v627, 7
    %v629 = vsub.s32 %v626, %v628
    %v630 = vrot.slane %v622, %v629
    %v632 = vunpack.c.l.s4 1966171168
    %v633 = vunpack.c.0.s8 %v632
    %v634 = vlaneseq
    %v635 = vshrl.u32 %v634, 7
    %v636 = vsub.s32 %v633, %v635
    %v637 = vrot.slane %v630, %v636
    %638 = vrot.lane.b32.xlu0 %v637, 64
    %v639 = vpop.permute.xlu0 %638
    %s641 = scalar_lea.vmem [#allocation14], 1
    %642 = vst.msk [vmem:[%s641] sm:$0x1] %vm457, %v639
    %v643 = vpack.c.bf16 %v621, %v621
    %v646 = vunpack.c.l.s4 1966171168
    %v647 = vunpack.c.0.s8 %v646
    %v648 = vlaneseq
    %v649 = vshrl.u32 %v648, 7
    %v650 = vsub.s32 %v647, %v649
    %v651 = vrot.slane %v643, %v650
    %v653 = vunpack.c.l.s4 1966171168
    %v654 = vunpack.c.0.s8 %v653
    %v655 = vlaneseq
    %v656 = vshrl.u32 %v655, 7
    %v657 = vsub.s32 %v654, %v656
    %v658 = vrot.slane %v651, %v657
    %659 = vrot.lane.b32.xlu0 %v658, 64
    %v660 = vpop.permute.xlu0 %659
    %s662 = scalar_lea.vmem [#allocation15], 6
    %663 = vst.msk [vmem:[%s662] sm:$0x1] %vm457, %v660
    %v664 = vld [vmem:[#allocation2 + $0x4] sm:$0x3]
    %665 = vrot.lane.b32.xlu0 %v622, 64
    %v666 = vpop.permute.xlu0 %665
    %v668 = vsel %vm144, %v666, 0
    %670 = vmatprep.subr.bf16.mxu0 0
    %671 = vmatpush1.bf16.msra.mxu0 %v276
    %672 = vmatprep.subr.bf16.mxu0 0
    %673 = vmatpush1.bf16.msra.mxu0 %v277
    %674 = vmatprep.subr.bf16.mxu0 0
    %675 = vmatpush1.bf16.msra.mxu0 0
    %676 = vmatprep.subr.bf16.mxu0 0
    %677 = vmatpush1.bf16.msra.mxu0 0
    %678 = vmatprep.subr.bf16.mxu0 0
    %679 = vmatpush1.bf16.msra.mxu0 0
    %680 = vmatprep.subr.bf16.mxu0 0
    %681 = vmatpush1.bf16.msra.mxu0 0
    %682 = vmatprep.subr.bf16.mxu0 0
    %683 = vmatpush1.bf16.msra.mxu0 0
    %684 = vmatprep.subr.bf16.mxu0 0
    %685 = vmatpush1.bf16.msra.mxu0 0
    %686 = vmatprep.subr.bf16.mxu0 0
    %687 = vmatpush1.bf16.msra.mxu0 0
    %688 = vmatprep.subr.bf16.mxu0 0
    %689 = vmatpush1.bf16.msra.mxu0 0
    %690 = vmatprep.subr.bf16.mxu0 0
    %691 = vmatpush1.bf16.msra.mxu0 0
    %692 = vmatprep.subr.bf16.mxu0 0
    %693 = vmatpush1.bf16.msra.mxu0 0
    %694 = vmatprep.subr.bf16.mxu0 0
    %695 = vmatpush1.bf16.msra.mxu0 0
    %696 = vmatprep.subr.bf16.mxu0 0
    %697 = vmatpush1.bf16.msra.mxu0 0
    %698 = vmatprep.subr.bf16.mxu0 0
    %699 = vmatpush1.bf16.msra.mxu0 0
    %700 = vmatprep.subr.bf16.mxu0 0
    %701 = vmatpush1.bf16.msra.mxu0 0
    %702 = vmatprep.mubr.bf16.mxu0 0
    %703 = vmatmul.mubr.bf16.gmra.mrb[0].mxu0 %v668
    %v704 = vpop.f32.mrb[0].mxu0
    %v705 = vadd.f32 0.0, %v704
    %v706 = vpop.f32.mrb[0].mxu0
    %v707 = vpop.f32.mrb[0].mxu0
    %v708 = vpop.f32.mrb[0].mxu0
    %709 = vdwg.mxu0
    %v710 = vadd.f32 %v664, %v705
    %v711 = vld [vmem:[#allocation3 + $0xa] sm:$0x3]
    %712 = vrot.lane.b32.xlu0 %v643, 64
    %v713 = vpop.permute.xlu0 %712
    %v715 = vsel %vm144, %v713, 0
    %717 = vmatprep.subr.bf16.mxu0 0
    %718 = vmatpush1.bf16.msra.mxu0 %v334
    %719 = vmatprep.subr.bf16.mxu0 0
    %720 = vmatpush1.bf16.msra.mxu0 %v335
    %721 = vmatprep.subr.bf16.mxu0 0
    %722 = vmatpush1.bf16.msra.mxu0 0
    %723 = vmatprep.subr.bf16.mxu0 0
    %724 = vmatpush1.bf16.msra.mxu0 0
    %725 = vmatprep.subr.bf16.mxu0 0
    %726 = vmatpush1.bf16.msra.mxu0 0
    %727 = vmatprep.subr.bf16.mxu0 0
    %728 = vmatpush1.bf16.msra.mxu0 0
    %729 = vmatprep.subr.bf16.mxu0 0
    %730 = vmatpush1.bf16.msra.mxu0 0
    %731 = vmatprep.subr.bf16.mxu0 0
    %732 = vmatpush1.bf16.msra.mxu0 0
    %733 = vmatprep.subr.bf16.mxu0 0
    %734 = vmatpush1.bf16.msra.mxu0 0
    %735 = vmatprep.subr.bf16.mxu0 0
    %736 = vmatpush1.bf16.msra.mxu0 0
    %737 = vmatprep.subr.bf16.mxu0 0
    %738 = vmatpush1.bf16.msra.mxu0 0
    %739 = vmatprep.subr.bf16.mxu0 0
    %740 = vmatpush1.bf16.msra.mxu0 0
    %741 = vmatprep.subr.bf16.mxu0 0
    %742 = vmatpush1.bf16.msra.mxu0 0
    %743 = vmatprep.subr.bf16.mxu0 0
    %744 = vmatpush1.bf16.msra.mxu0 0
    %745 = vmatprep.subr.bf16.mxu0 0
    %746 = vmatpush1.bf16.msra.mxu0 0
    %747 = vmatprep.subr.bf16.mxu0 0
    %748 = vmatpush1.bf16.msra.mxu0 0
    %749 = vmatprep.mubr.bf16.mxu0 0
    %750 = vmatmul.mubr.bf16.gmra.mrb[0].mxu0 %v715
    %v751 = vpop.f32.mrb[0].mxu0
    %v752 = vadd.f32 0.0, %v751
    %v753 = vpop.f32.mrb[0].mxu0
    %v754 = vpop.f32.mrb[0].mxu0
    %v755 = vpop.f32.mrb[0].mxu0
    %756 = vdwg.mxu0
    %v757 = vadd.f32 %v711, %v752
    %v758 = vxor.u32 %v710, 2147483648
    %v759 = vmul.f32 %v758, 1.442695
    %v760 = vpow.pop %v759
    %v761 = vadd.f32 %v760, 1.0
    %v762 = vrcp.pop %v761
    %v763 = vmul.f32 1.0, %v762
    %v764 = vtanh.pop %v710
    %v765 = vmul.f32 %v763, %v591
    %767 = vrot.lane.b32.xlu0 %v764, 32
    %v768 = vpop.permute.xlu0 %767
    %v770 = vmul.f32 %v763, %v768
    %772 = vrot.lane.b32.xlu0 %v770, 32
    %v773 = vpop.permute.xlu0 %772
    %v775 = vadd.f32 %v765, %v773
    %v776 = vtanh.pop %v775
    %778 = vrot.lane.b32.xlu0 %v776, 32
    %v779 = vpop.permute.xlu0 %778
    %v781 = vmul.f32 %v763, %v779
    %v782 = vxor.u32 %v757, 2147483648
    %v783 = vmul.f32 %v782, 1.442695
    %v784 = vpow.pop %v783
    %v785 = vadd.f32 %v784, 1.0
    %v786 = vrcp.pop %v785
    %v787 = vmul.f32 1.0, %v786
    %v788 = vtanh.pop %v757
    %v789 = vmul.f32 %v787, %v615
    %791 = vrot.lane.b32.xlu0 %v788, 32
    %v792 = vpop.permute.xlu0 %791
    %v794 = vmul.f32 %v787, %v792
    %796 = vrot.lane.b32.xlu0 %v794, 32
    %v797 = vpop.permute.xlu0 %796
    %v799 = vadd.f32 %v789, %v797
    %v800 = vtanh.pop %v799
    %802 = vrot.lane.b32.xlu0 %v800, 32
    %v803 = vpop.permute.xlu0 %802
    %v805 = vmul.f32 %v787, %v803
    %v806 = vpack.c.bf16 %v781, %v781
    %v809 = vunpack.c.l.s4 1966171168
    %v810 = vunpack.c.0.s8 %v809
    %v811 = vlaneseq
    %v812 = vshrl.u32 %v811, 7
    %v813 = vsub.s32 %v810, %v812
    %v814 = vrot.slane %v806, %v813
    %v816 = vunpack.c.l.s4 1966171168
    %v817 = vunpack.c.0.s8 %v816
    %v818 = vlaneseq
    %v819 = vshrl.u32 %v818, 7
    %v820 = vsub.s32 %v817, %v819
    %v821 = vrot.slane %v814, %v820
    %822 = vrot.lane.b32.xlu0 %v821, 64
    %v823 = vpop.permute.xlu0 %822
    %s825 = scalar_lea.vmem [#allocation14], 2
    %826 = vst.msk [vmem:[%s825] sm:$0x1] %vm457, %v823
    %v827 = vpack.c.bf16 %v805, %v805
    %v830 = vunpack.c.l.s4 1966171168
    %v831 = vunpack.c.0.s8 %v830
    %v832 = vlaneseq
    %v833 = vshrl.u32 %v832, 7
    %v834 = vsub.s32 %v831, %v833
    %v835 = vrot.slane %v827, %v834
    %v837 = vunpack.c.l.s4 1966171168
    %v838 = vunpack.c.0.s8 %v837
    %v839 = vlaneseq
    %v840 = vshrl.u32 %v839, 7
    %v841 = vsub.s32 %v838, %v840
    %v842 = vrot.slane %v835, %v841
    %843 = vrot.lane.b32.xlu0 %v842, 64
    %v844 = vpop.permute.xlu0 %843
    %s846 = scalar_lea.vmem [#allocation15], 5
    %847 = vst.msk [vmem:[%s846] sm:$0x1] %vm457, %v844
    %v848 = vld [vmem:[#allocation2 + $0x6] sm:$0x3]
    %849 = vrot.lane.b32.xlu0 %v806, 64
    %v850 = vpop.permute.xlu0 %849
    %v852 = vsel %vm144, %v850, 0
    %854 = vmatprep.subr.bf16.mxu0 0
    %855 = vmatpush1.bf16.msra.mxu0 %v276
    %856 = vmatprep.subr.bf16.mxu0 0
    %857 = vmatpush1.bf16.msra.mxu0 %v277
    %858 = vmatprep.subr.bf16.mxu0 0
    %859 = vmatpush1.bf16.msra.mxu0 0
    %860 = vmatprep.subr.bf16.mxu0 0
    %861 = vmatpush1.bf16.msra.mxu0 0
    %862 = vmatprep.subr.bf16.mxu0 0
    %863 = vmatpush1.bf16.msra.mxu0 0
    %864 = vmatprep.subr.bf16.mxu0 0
    %865 = vmatpush1.bf16.msra.mxu0 0
    %866 = vmatprep.subr.bf16.mxu0 0
    %867 = vmatpush1.bf16.msra.mxu0 0
    %868 = vmatprep.subr.bf16.mxu0 0
    %869 = vmatpush1.bf16.msra.mxu0 0
    %870 = vmatprep.subr.bf16.mxu0 0
    %871 = vmatpush1.bf16.msra.mxu0 0
    %872 = vmatprep.subr.bf16.mxu0 0
    %873 = vmatpush1.bf16.msra.mxu0 0
    %874 = vmatprep.subr.bf16.mxu0 0
    %875 = vmatpush1.bf16.msra.mxu0 0
    %876 = vmatprep.subr.bf16.mxu0 0
    %877 = vmatpush1.bf16.msra.mxu0 0
    %878 = vmatprep.subr.bf16.mxu0 0
    %879 = vmatpush1.bf16.msra.mxu0 0
    %880 = vmatprep.subr.bf16.mxu0 0
    %881 = vmatpush1.bf16.msra.mxu0 0
    %882 = vmatprep.subr.bf16.mxu0 0
    %883 = vmatpush1.bf16.msra.mxu0 0
    %884 = vmatprep.subr.bf16.mxu0 0
    %885 = vmatpush1.bf16.msra.mxu0 0
    %886 = vmatprep.mubr.bf16.mxu0 0
    %887 = vmatmul.mubr.bf16.gmra.mrb[0].mxu0 %v852
    %v888 = vpop.f32.mrb[0].mxu0
    %v889 = vadd.f32 0.0, %v888
    %v890 = vpop.f32.mrb[0].mxu0
    %v891 = vpop.f32.mrb[0].mxu0
    %v892 = vpop.f32.mrb[0].mxu0
    %893 = vdwg.mxu0
    %v894 = vadd.f32 %v848, %v889
    %v895 = vld [vmem:[#allocation3 + $0x8] sm:$0x3]
    %896 = vrot.lane.b32.xlu0 %v827, 64
    %v897 = vpop.permute.xlu0 %896
    %v899 = vsel %vm144, %v897, 0
    %901 = vmatprep.subr.bf16.mxu0 0
    %902 = vmatpush1.bf16.msra.mxu0 %v334
    %903 = vmatprep.subr.bf16.mxu0 0
    %904 = vmatpush1.bf16.msra.mxu0 %v335
    %905 = vmatprep.subr.bf16.mxu0 0
    %906 = vmatpush1.bf16.msra.mxu0 0
    %907 = vmatprep.subr.bf16.mxu0 0
    %908 = vmatpush1.bf16.msra.mxu0 0
    %909 = vmatprep.subr.bf16.mxu0 0
    %910 = vmatpush1.bf16.msra.mxu0 0
    %911 = vmatprep.subr.bf16.mxu0 0
    %912 = vmatpush1.bf16.msra.mxu0 0
    %913 = vmatprep.subr.bf16.mxu0 0
    %914 = vmatpush1.bf16.msra.mxu0 0
    %915 = vmatprep.subr.bf16.mxu0 0
    %916 = vmatpush1.bf16.msra.mxu0 0
    %917 = vmatprep.subr.bf16.mxu0 0
    %918 = vmatpush1.bf16.msra.mxu0 0
    %919 = vmatprep.subr.bf16.mxu0 0
    %920 = vmatpush1.bf16.msra.mxu0 0
    %921 = vmatprep.subr.bf16.mxu0 0
    %922 = vmatpush1.bf16.msra.mxu0 0
    %923 = vmatprep.subr.bf16.mxu0 0
    %924 = vmatpush1.bf16.msra.mxu0 0
    %925 = vmatprep.subr.bf16.mxu0 0
    %926 = vmatpush1.bf16.msra.mxu0 0
    %927 = vmatprep.subr.bf16.mxu0 0
    %928 = vmatpush1.bf16.msra.mxu0 0
    %929 = vmatprep.subr.bf16.mxu0 0
    %930 = vmatpush1.bf16.msra.mxu0 0
    %931 = vmatprep.subr.bf16.mxu0 0
    %932 = vmatpush1.bf16.msra.mxu0 0
    %933 = vmatprep.mubr.bf16.mxu0 0
    %934 = vmatmul.mubr.bf16.gmra.mrb[0].mxu0 %v899
    %v935 = vpop.f32.mrb[0].mxu0
    %v936 = vadd.f32 0.0, %v935
    %v937 = vpop.f32.mrb[0].mxu0
    %v938 = vpop.f32.mrb[0].mxu0
    %v939 = vpop.f32.mrb[0].mxu0
    %940 = vdwg.mxu0
    %v941 = vadd.f32 %v895, %v936
    %v942 = vxor.u32 %v894, 2147483648
    %v943 = vmul.f32 %v942, 1.442695
    %v944 = vpow.pop %v943
    %v945 = vadd.f32 %v944, 1.0
    %v946 = vrcp.pop %v945
    %v947 = vmul.f32 1.0, %v946
    %v948 = vtanh.pop %v894
    %v949 = vmul.f32 %v947, %v775
    %951 = vrot.lane.b32.xlu0 %v948, 32
    %v952 = vpop.permute.xlu0 %951
    %v954 = vmul.f32 %v947, %v952
    %956 = vrot.lane.b32.xlu0 %v954, 32
    %v957 = vpop.permute.xlu0 %956
    %v959 = vadd.f32 %v949, %v957
    %v960 = vtanh.pop %v959
    %962 = vrot.lane.b32.xlu0 %v960, 32
    %v963 = vpop.permute.xlu0 %962
    %v965 = vmul.f32 %v947, %v963
    %v966 = vxor.u32 %v941, 2147483648
    %v967 = vmul.f32 %v966, 1.442695
    %v968 = vpow.pop %v967
    %v969 = vadd.f32 %v968, 1.0
    %v970 = vrcp.pop %v969
    %v971 = vmul.f32 1.0, %v970
    %v972 = vtanh.pop %v941
    %v973 = vmul.f32 %v971, %v799
    %975 = vrot.lane.b32.xlu0 %v972, 32
    %v976 = vpop.permute.xlu0 %975
    %v978 = vmul.f32 %v971, %v976
    %980 = vrot.lane.b32.xlu0 %v978, 32
    %v981 = vpop.permute.xlu0 %980
    %v983 = vadd.f32 %v973, %v981
    %v984 = vtanh.pop %v983
    %986 = vrot.lane.b32.xlu0 %v984, 32
    %v987 = vpop.permute.xlu0 %986
    %v989 = vmul.f32 %v971, %v987
    %v990 = vpack.c.bf16 %v965, %v965
    %v993 = vunpack.c.l.s4 1966171168
    %v994 = vunpack.c.0.s8 %v993
    %v995 = vlaneseq
    %v996 = vshrl.u32 %v995, 7
    %v997 = vsub.s32 %v994, %v996
    %v998 = vrot.slane %v990, %v997
    %v1000 = vunpack.c.l.s4 1966171168
    %v1001 = vunpack.c.0.s8 %v1000
    %v1002 = vlaneseq
    %v1003 = vshrl.u32 %v1002, 7
    %v1004 = vsub.s32 %v1001, %v1003
    %v1005 = vrot.slane %v998, %v1004
    %1006 = vrot.lane.b32.xlu0 %v1005, 64
    %v1007 = vpop.permute.xlu0 %1006
    %s1009 = scalar_lea.vmem [#allocation14], 3
    %1010 = vst.msk [vmem:[%s1009] sm:$0x1] %vm457, %v1007
    %v1011 = vpack.c.bf16 %v989, %v989
    %v1014 = vunpack.c.l.s4 1966171168
    %v1015 = vunpack.c.0.s8 %v1014
    %v1016 = vlaneseq
    %v1017 = vshrl.u32 %v1016, 7
    %v1018 = vsub.s32 %v1015, %v1017
    %v1019 = vrot.slane %v1011, %v1018
    %v1021 = vunpack.c.l.s4 1966171168
    %v1022 = vunpack.c.0.s8 %v1021
    %v1023 = vlaneseq
    %v1024 = vshrl.u32 %v1023, 7
    %v1025 = vsub.s32 %v1022, %v1024
    %v1026 = vrot.slane %v1019, %v1025
    %1027 = vrot.lane.b32.xlu0 %v1026, 64
    %v1028 = vpop.permute.xlu0 %1027
    %s1030 = scalar_lea.vmem [#allocation15], 4
    %1031 = vst.msk [vmem:[%s1030] sm:$0x1] %vm457, %v1028
    %v1032 = vld [vmem:[#allocation2 + $0x8] sm:$0x3]
    %1033 = vrot.lane.b32.xlu0 %v990, 64
    %v1034 = vpop.permute.xlu0 %1033
    %v1036 = vsel %vm144, %v1034, 0
    %1038 = vmatprep.subr.bf16.mxu0 0
    %1039 = vmatpush1.bf16.msra.mxu0 %v276
    %1040 = vmatprep.subr.bf16.mxu0 0
    %1041 = vmatpush1.bf16.msra.mxu0 %v277
    %1042 = vmatprep.subr.bf16.mxu0 0
    %1043 = vmatpush1.bf16.msra.mxu0 0
    %1044 = vmatprep.subr.bf16.mxu0 0
    %1045 = vmatpush1.bf16.msra.mxu0 0
    %1046 = vmatprep.subr.bf16.mxu0 0
    %1047 = vmatpush1.bf16.msra.mxu0 0
    %1048 = vmatprep.subr.bf16.mxu0 0
    %1049 = vmatpush1.bf16.msra.mxu0 0
    %1050 = vmatprep.subr.bf16.mxu0 0
    %1051 = vmatpush1.bf16.msra.mxu0 0
    %1052 = vmatprep.subr.bf16.mxu0 0
    %1053 = vmatpush1.bf16.msra.mxu0 0
    %1054 = vmatprep.subr.bf16.mxu0 0
    %1055 = vmatpush1.bf16.msra.mxu0 0
    %1056 = vmatprep.subr.bf16.mxu0 0
    %1057 = vmatpush1.bf16.msra.mxu0 0
    %1058 = vmatprep.subr.bf16.mxu0 0
    %1059 = vmatpush1.bf16.msra.mxu0 0
    %1060 = vmatprep.subr.bf16.mxu0 0
    %1061 = vmatpush1.bf16.msra.mxu0 0
    %1062 = vmatprep.subr.bf16.mxu0 0
    %1063 = vmatpush1.bf16.msra.mxu0 0
    %1064 = vmatprep.subr.bf16.mxu0 0
    %1065 = vmatpush1.bf16.msra.mxu0 0
    %1066 = vmatprep.subr.bf16.mxu0 0
    %1067 = vmatpush1.bf16.msra.mxu0 0
    %1068 = vmatprep.subr.bf16.mxu0 0
    %1069 = vmatpush1.bf16.msra.mxu0 0
    %1070 = vmatprep.mubr.bf16.mxu0 0
    %1071 = vmatmul.mubr.bf16.gmra.mrb[0].mxu0 %v1036
    %v1072 = vpop.f32.mrb[0].mxu0
    %v1073 = vadd.f32 0.0, %v1072
    %v1074 = vpop.f32.mrb[0].mxu0
    %v1075 = vpop.f32.mrb[0].mxu0
    %v1076 = vpop.f32.mrb[0].mxu0
    %1077 = vdwg.mxu0
    %v1078 = vadd.f32 %v1032, %v1073
    %v1079 = vld [vmem:[#allocation3 + $0x6] sm:$0x3]
    %1080 = vrot.lane.b32.xlu0 %v1011, 64
    %v1081 = vpop.permute.xlu0 %1080
    %v1083 = vsel %vm144, %v1081, 0
    %1085 = vmatprep.subr.bf16.mxu0 0
    %1086 = vmatpush1.bf16.msra.mxu0 %v334
    %1087 = vmatprep.subr.bf16.mxu0 0
    %1088 = vmatpush1.bf16.msra.mxu0 %v335
    %1089 = vmatprep.subr.bf16.mxu0 0
    %1090 = vmatpush1.bf16.msra.mxu0 0
    %1091 = vmatprep.subr.bf16.mxu0 0
    %1092 = vmatpush1.bf16.msra.mxu0 0
    %1093 = vmatprep.subr.bf16.mxu0 0
    %1094 = vmatpush1.bf16.msra.mxu0 0
    %1095 = vmatprep.subr.bf16.mxu0 0
    %1096 = vmatpush1.bf16.msra.mxu0 0
    %1097 = vmatprep.subr.bf16.mxu0 0
    %1098 = vmatpush1.bf16.msra.mxu0 0
    %1099 = vmatprep.subr.bf16.mxu0 0
    %1100 = vmatpush1.bf16.msra.mxu0 0
    %1101 = vmatprep.subr.bf16.mxu0 0
    %1102 = vmatpush1.bf16.msra.mxu0 0
    %1103 = vmatprep.subr.bf16.mxu0 0
    %1104 = vmatpush1.bf16.msra.mxu0 0
    %1105 = vmatprep.subr.bf16.mxu0 0
    %1106 = vmatpush1.bf16.msra.mxu0 0
    %1107 = vmatprep.subr.bf16.mxu0 0
    %1108 = vmatpush1.bf16.msra.mxu0 0
    %1109 = vmatprep.subr.bf16.mxu0 0
    %1110 = vmatpush1.bf16.msra.mxu0 0
    %1111 = vmatprep.subr.bf16.mxu0 0
    %1112 = vmatpush1.bf16.msra.mxu0 0
    %1113 = vmatprep.subr.bf16.mxu0 0
    %1114 = vmatpush1.bf16.msra.mxu0 0
    %1115 = vmatprep.subr.bf16.mxu0 0
    %1116 = vmatpush1.bf16.msra.mxu0 0
    %1117 = vmatprep.mubr.bf16.mxu0 0
    %1118 = vmatmul.mubr.bf16.gmra.mrb[0].mxu0 %v1083
    %v1119 = vpop.f32.mrb[0].mxu0
    %v1120 = vadd.f32 0.0, %v1119
    %v1121 = vpop.f32.mrb[0].mxu0
    %v1122 = vpop.f32.mrb[0].mxu0
    %v1123 = vpop.f32.mrb[0].mxu0
    %1124 = vdwg.mxu0
    %v1125 = vadd.f32 %v1079, %v1120
    %v1126 = vxor.u32 %v1078, 2147483648
    %v1127 = vmul.f32 %v1126, 1.442695
    %v1128 = vpow.pop %v1127
    %v1129 = vadd.f32 %v1128, 1.0
    %v1130 = vrcp.pop %v1129
    %v1131 = vmul.f32 1.0, %v1130
    %v1132 = vtanh.pop %v1078
    %v1133 = vmul.f32 %v1131, %v959
    %1135 = vrot.lane.b32.xlu0 %v1132, 32
    %v1136 = vpop.permute.xlu0 %1135
    %v1138 = vmul.f32 %v1131, %v1136
    %1140 = vrot.lane.b32.xlu0 %v1138, 32
    %v1141 = vpop.permute.xlu0 %1140
    %v1143 = vadd.f32 %v1133, %v1141
    %v1144 = vtanh.pop %v1143
    %1146 = vrot.lane.b32.xlu0 %v1144, 32
    %v1147 = vpop.permute.xlu0 %1146
    %v1149 = vmul.f32 %v1131, %v1147
    %v1150 = vxor.u32 %v1125, 2147483648
    %v1151 = vmul.f32 %v1150, 1.442695
    %v1152 = vpow.pop %v1151
    %v1153 = vadd.f32 %v1152, 1.0
    %v1154 = vrcp.pop %v1153
    %v1155 = vmul.f32 1.0, %v1154
    %v1156 = vtanh.pop %v1125
    %v1157 = vmul.f32 %v1155, %v983
    %1159 = vrot.lane.b32.xlu0 %v1156, 32
    %v1160 = vpop.permute.xlu0 %1159
    %v1162 = vmul.f32 %v1155, %v1160
    %1164 = vrot.lane.b32.xlu0 %v1162, 32
    %v1165 = vpop.permute.xlu0 %1164
    %v1167 = vadd.f32 %v1157, %v1165
    %v1168 = vtanh.pop %v1167
    %1170 = vrot.lane.b32.xlu0 %v1168, 32
    %v1171 = vpop.permute.xlu0 %1170
    %v1173 = vmul.f32 %v1155, %v1171
    %v1174 = vpack.c.bf16 %v1149, %v1149
    %v1177 = vunpack.c.l.s4 1966171168
    %v1178 = vunpack.c.0.s8 %v1177
    %v1179 = vlaneseq
    %v1180 = vshrl.u32 %v1179, 7
    %v1181 = vsub.s32 %v1178, %v1180
    %v1182 = vrot.slane %v1174, %v1181
    %v1184 = vunpack.c.l.s4 1966171168
    %v1185 = vunpack.c.0.s8 %v1184
    %v1186 = vlaneseq
    %v1187 = vshrl.u32 %v1186, 7
    %v1188 = vsub.s32 %v1185, %v1187
    %v1189 = vrot.slane %v1182, %v1188
    %1190 = vrot.lane.b32.xlu0 %v1189, 64
    %v1191 = vpop.permute.xlu0 %1190
    %s1193 = scalar_lea.vmem [#allocation14], 4
    %1194 = vst.msk [vmem:[%s1193] sm:$0x1] %vm457, %v1191
    %v1195 = vpack.c.bf16 %v1173, %v1173
    %v1198 = vunpack.c.l.s4 1966171168
    %v1199 = vunpack.c.0.s8 %v1198
    %v1200 = vlaneseq
    %v1201 = vshrl.u32 %v1200, 7
    %v1202 = vsub.s32 %v1199, %v1201
    %v1203 = vrot.slane %v1195, %v1202
    %v1205 = vunpack.c.l.s4 1966171168
    %v1206 = vunpack.c.0.s8 %v1205
    %v1207 = vlaneseq
    %v1208 = vshrl.u32 %v1207, 7
    %v1209 = vsub.s32 %v1206, %v1208
    %v1210 = vrot.slane %v1203, %v1209
    %1211 = vrot.lane.b32.xlu0 %v1210, 64
    %v1212 = vpop.permute.xlu0 %1211
    %s1214 = scalar_lea.vmem [#allocation15], 3
    %1215 = vst.msk [vmem:[%s1214] sm:$0x1] %vm457, %v1212
    %v1216 = vld [vmem:[#allocation2 + $0xa] sm:$0x3]
    %1217 = vrot.lane.b32.xlu0 %v1174, 64
    %v1218 = vpop.permute.xlu0 %1217
    %v1220 = vsel %vm144, %v1218, 0
    %1222 = vmatprep.subr.bf16.mxu0 0
    %1223 = vmatpush1.bf16.msra.mxu0 %v276
    %1224 = vmatprep.subr.bf16.mxu0 0
    %1225 = vmatpush1.bf16.msra.mxu0 %v277
    %1226 = vmatprep.subr.bf16.mxu0 0
    %1227 = vmatpush1.bf16.msra.mxu0 0
    %1228 = vmatprep.subr.bf16.mxu0 0
    %1229 = vmatpush1.bf16.msra.mxu0 0
    %1230 = vmatprep.subr.bf16.mxu0 0
    %1231 = vmatpush1.bf16.msra.mxu0 0
    %1232 = vmatprep.subr.bf16.mxu0 0
    %1233 = vmatpush1.bf16.msra.mxu0 0
    %1234 = vmatprep.subr.bf16.mxu0 0
    %1235 = vmatpush1.bf16.msra.mxu0 0
    %1236 = vmatprep.subr.bf16.mxu0 0
    %1237 = vmatpush1.bf16.msra.mxu0 0
    %1238 = vmatprep.subr.bf16.mxu0 0
    %1239 = vmatpush1.bf16.msra.mxu0 0
    %1240 = vmatprep.subr.bf16.mxu0 0
    %1241 = vmatpush1.bf16.msra.mxu0 0
    %1242 = vmatprep.subr.bf16.mxu0 0
    %1243 = vmatpush1.bf16.msra.mxu0 0
    %1244 = vmatprep.subr.bf16.mxu0 0
    %1245 = vmatpush1.bf16.msra.mxu0 0
    %1246 = vmatprep.subr.bf16.mxu0 0
    %1247 = vmatpush1.bf16.msra.mxu0 0
    %1248 = vmatprep.subr.bf16.mxu0 0
    %1249 = vmatpush1.bf16.msra.mxu0 0
    %1250 = vmatprep.subr.bf16.mxu0 0
    %1251 = vmatpush1.bf16.msra.mxu0 0
    %1252 = vmatprep.subr.bf16.mxu0 0
    %1253 = vmatpush1.bf16.msra.mxu0 0
    %1254 = vmatprep.mubr.bf16.mxu0 0
    %1255 = vmatmul.mubr.bf16.gmra.mrb[0].mxu0 %v1220
    %v1256 = vpop.f32.mrb[0].mxu0
    %v1257 = vadd.f32 0.0, %v1256
    %v1258 = vpop.f32.mrb[0].mxu0
    %v1259 = vpop.f32.mrb[0].mxu0
    %v1260 = vpop.f32.mrb[0].mxu0
    %1261 = vdwg.mxu0
    %v1262 = vadd.f32 %v1216, %v1257
    %v1263 = vld [vmem:[#allocation3 + $0x4] sm:$0x3]
    %1264 = vrot.lane.b32.xlu0 %v1195, 64
    %v1265 = vpop.permute.xlu0 %1264
    %v1267 = vsel %vm144, %v1265, 0
    %1269 = vmatprep.subr.bf16.mxu0 0
    %1270 = vmatpush1.bf16.msra.mxu0 %v334
    %1271 = vmatprep.subr.bf16.mxu0 0
    %1272 = vmatpush1.bf16.msra.mxu0 %v335
    %1273 = vmatprep.subr.bf16.mxu0 0
    %1274 = vmatpush1.bf16.msra.mxu0 0
    %1275 = vmatprep.subr.bf16.mxu0 0
    %1276 = vmatpush1.bf16.msra.mxu0 0
    %1277 = vmatprep.subr.bf16.mxu0 0
    %1278 = vmatpush1.bf16.msra.mxu0 0
    %1279 = vmatprep.subr.bf16.mxu0 0
    %1280 = vmatpush1.bf16.msra.mxu0 0
    %1281 = vmatprep.subr.bf16.mxu0 0
    %1282 = vmatpush1.bf16.msra.mxu0 0
    %1283 = vmatprep.subr.bf16.mxu0 0
    %1284 = vmatpush1.bf16.msra.mxu0 0
    %1285 = vmatprep.subr.bf16.mxu0 0
    %1286 = vmatpush1.bf16.msra.mxu0 0
    %1287 = vmatprep.subr.bf16.mxu0 0
    %1288 = vmatpush1.bf16.msra.mxu0 0
    %1289 = vmatprep.subr.bf16.mxu0 0
    %1290 = vmatpush1.bf16.msra.mxu0 0
    %1291 = vmatprep.subr.bf16.mxu0 0
    %1292 = vmatpush1.bf16.msra.mxu0 0
    %1293 = vmatprep.subr.bf16.mxu0 0
    %1294 = vmatpush1.bf16.msra.mxu0 0
    %1295 = vmatprep.subr.bf16.mxu0 0
    %1296 = vmatpush1.bf16.msra.mxu0 0
    %1297 = vmatprep.subr.bf16.mxu0 0
    %1298 = vmatpush1.bf16.msra.mxu0 0
    %1299 = vmatprep.subr.bf16.mxu0 0
    %1300 = vmatpush1.bf16.msra.mxu0 0
    %1301 = vmatprep.mubr.bf16.mxu0 0
    %1302 = vmatmul.mubr.bf16.gmra.mrb[0].mxu0 %v1267
    %v1303 = vpop.f32.mrb[0].mxu0
    %v1304 = vadd.f32 0.0, %v1303
    %v1305 = vpop.f32.mrb[0].mxu0
    %v1306 = vpop.f32.mrb[0].mxu0
    %v1307 = vpop.f32.mrb[0].mxu0
    %1308 = vdwg.mxu0
    %v1309 = vadd.f32 %v1263, %v1304
    %v1310 = vxor.u32 %v1262, 2147483648
    %v1311 = vmul.f32 %v1310, 1.442695
    %v1312 = vpow.pop %v1311
    %v1313 = vadd.f32 %v1312, 1.0
    %v1314 = vrcp.pop %v1313
    %v1315 = vmul.f32 1.0, %v1314
    %v1316 = vtanh.pop %v1262
    %v1317 = vmul.f32 %v1315, %v1143
    %1319 = vrot.lane.b32.xlu0 %v1316, 32
    %v1320 = vpop.permute.xlu0 %1319
    %v1322 = vmul.f32 %v1315, %v1320
    %1324 = vrot.lane.b32.xlu0 %v1322, 32
    %v1325 = vpop.permute.xlu0 %1324
    %v1327 = vadd.f32 %v1317, %v1325
    %v1328 = vtanh.pop %v1327
    %1330 = vrot.lane.b32.xlu0 %v1328, 32
    %v1331 = vpop.permute.xlu0 %1330
    %v1333 = vmul.f32 %v1315, %v1331
    %v1334 = vxor.u32 %v1309, 2147483648
    %v1335 = vmul.f32 %v1334, 1.442695
    %v1336 = vpow.pop %v1335
    %v1337 = vadd.f32 %v1336, 1.0
    %v1338 = vrcp.pop %v1337
    %v1339 = vmul.f32 1.0, %v1338
    %v1340 = vtanh.pop %v1309
    %v1341 = vmul.f32 %v1339, %v1167
    %1343 = vrot.lane.b32.xlu0 %v1340, 32
    %v1344 = vpop.permute.xlu0 %1343
    %v1346 = vmul.f32 %v1339, %v1344
    %1348 = vrot.lane.b32.xlu0 %v1346, 32
    %v1349 = vpop.permute.xlu0 %1348
    %v1351 = vadd.f32 %v1341, %v1349
    %v1352 = vtanh.pop %v1351
    %1354 = vrot.lane.b32.xlu0 %v1352, 32
    %v1355 = vpop.permute.xlu0 %1354
    %v1357 = vmul.f32 %v1339, %v1355
    %v1358 = vpack.c.bf16 %v1333, %v1333
    %v1361 = vunpack.c.l.s4 1966171168
    %v1362 = vunpack.c.0.s8 %v1361
    %v1363 = vlaneseq
    %v1364 = vshrl.u32 %v1363, 7
    %v1365 = vsub.s32 %v1362, %v1364
    %v1366 = vrot.slane %v1358, %v1365
    %v1368 = vunpack.c.l.s4 1966171168
    %v1369 = vunpack.c.0.s8 %v1368
    %v1370 = vlaneseq
    %v1371 = vshrl.u32 %v1370, 7
    %v1372 = vsub.s32 %v1369, %v1371
    %v1373 = vrot.slane %v1366, %v1372
    %1374 = vrot.lane.b32.xlu0 %v1373, 64
    %v1375 = vpop.permute.xlu0 %1374
    %s1377 = scalar_lea.vmem [#allocation14], 5
    %1378 = vst.msk [vmem:[%s1377] sm:$0x1] %vm457, %v1375
    %v1379 = vpack.c.bf16 %v1357, %v1357
    %v1382 = vunpack.c.l.s4 1966171168
    %v1383 = vunpack.c.0.s8 %v1382
    %v1384 = vlaneseq
    %v1385 = vshrl.u32 %v1384, 7
    %v1386 = vsub.s32 %v1383, %v1385
    %v1387 = vrot.slane %v1379, %v1386
    %v1389 = vunpack.c.l.s4 1966171168
    %v1390 = vunpack.c.0.s8 %v1389
    %v1391 = vlaneseq
    %v1392 = vshrl.u32 %v1391, 7
    %v1393 = vsub.s32 %v1390, %v1392
    %v1394 = vrot.slane %v1387, %v1393
    %1395 = vrot.lane.b32.xlu0 %v1394, 64
    %v1396 = vpop.permute.xlu0 %1395
    %s1398 = scalar_lea.vmem [#allocation15], 2
    %1399 = vst.msk [vmem:[%s1398] sm:$0x1] %vm457, %v1396
    %v1400 = vld [vmem:[#allocation2 + $0xc] sm:$0x3]
    %1401 = vrot.lane.b32.xlu0 %v1358, 64
    %v1402 = vpop.permute.xlu0 %1401
    %v1404 = vsel %vm144, %v1402, 0
    %1406 = vmatprep.subr.bf16.mxu0 0
    %1407 = vmatpush1.bf16.msra.mxu0 %v276
    %1408 = vmatprep.subr.bf16.mxu0 0
    %1409 = vmatpush1.bf16.msra.mxu0 %v277
    %1410 = vmatprep.subr.bf16.mxu0 0
    %1411 = vmatpush1.bf16.msra.mxu0 0
    %1412 = vmatprep.subr.bf16.mxu0 0
    %1413 = vmatpush1.bf16.msra.mxu0 0
    %1414 = vmatprep.subr.bf16.mxu0 0
    %1415 = vmatpush1.bf16.msra.mxu0 0
    %1416 = vmatprep.subr.bf16.mxu0 0
    %1417 = vmatpush1.bf16.msra.mxu0 0
    %1418 = vmatprep.subr.bf16.mxu0 0
    %1419 = vmatpush1.bf16.msra.mxu0 0
    %1420 = vmatprep.subr.bf16.mxu0 0
    %1421 = vmatpush1.bf16.msra.mxu0 0
    %1422 = vmatprep.subr.bf16.mxu0 0
    %1423 = vmatpush1.bf16.msra.mxu0 0
    %1424 = vmatprep.subr.bf16.mxu0 0
    %1425 = vmatpush1.bf16.msra.mxu0 0
    %1426 = vmatprep.subr.bf16.mxu0 0
    %1427 = vmatpush1.bf16.msra.mxu0 0
    %1428 = vmatprep.subr.bf16.mxu0 0
    %1429 = vmatpush1.bf16.msra.mxu0 0
    %1430 = vmatprep.subr.bf16.mxu0 0
    %1431 = vmatpush1.bf16.msra.mxu0 0
    %1432 = vmatprep.subr.bf16.mxu0 0
    %1433 = vmatpush1.bf16.msra.mxu0 0
    %1434 = vmatprep.subr.bf16.mxu0 0
    %1435 = vmatpush1.bf16.msra.mxu0 0
    %1436 = vmatprep.subr.bf16.mxu0 0
    %1437 = vmatpush1.bf16.msra.mxu0 0
    %1438 = vmatprep.mubr.bf16.mxu0 0
    %1439 = vmatmul.mubr.bf16.gmra.mrb[0].mxu0 %v1404
    %v1440 = vpop.f32.mrb[0].mxu0
    %v1441 = vadd.f32 0.0, %v1440
    %v1442 = vpop.f32.mrb[0].mxu0
    %v1443 = vpop.f32.mrb[0].mxu0
    %v1444 = vpop.f32.mrb[0].mxu0
    %1445 = vdwg.mxu0
    %v1446 = vadd.f32 %v1400, %v1441
    %v1447 = vld [vmem:[#allocation3 + $0x2] sm:$0x3]
    %1448 = vrot.lane.b32.xlu0 %v1379, 64
    %v1449 = vpop.permute.xlu0 %1448
    %v1451 = vsel %vm144, %v1449, 0
    %1453 = vmatprep.subr.bf16.mxu0 0
    %1454 = vmatpush1.bf16.msra.mxu0 %v334
    %1455 = vmatprep.subr.bf16.mxu0 0
    %1456 = vmatpush1.bf16.msra.mxu0 %v335
    %1457 = vmatprep.subr.bf16.mxu0 0
    %1458 = vmatpush1.bf16.msra.mxu0 0
    %1459 = vmatprep.subr.bf16.mxu0 0
    %1460 = vmatpush1.bf16.msra.mxu0 0
    %1461 = vmatprep.subr.bf16.mxu0 0
    %1462 = vmatpush1.bf16.msra.mxu0 0
    %1463 = vmatprep.subr.bf16.mxu0 0
    %1464 = vmatpush1.bf16.msra.mxu0 0
    %1465 = vmatprep.subr.bf16.mxu0 0
    %1466 = vmatpush1.bf16.msra.mxu0 0
    %1467 = vmatprep.subr.bf16.mxu0 0
    %1468 = vmatpush1.bf16.msra.mxu0 0
    %1469 = vmatprep.subr.bf16.mxu0 0
    %1470 = vmatpush1.bf16.msra.mxu0 0
    %1471 = vmatprep.subr.bf16.mxu0 0
    %1472 = vmatpush1.bf16.msra.mxu0 0
    %1473 = vmatprep.subr.bf16.mxu0 0
    %1474 = vmatpush1.bf16.msra.mxu0 0
    %1475 = vmatprep.subr.bf16.mxu0 0
    %1476 = vmatpush1.bf16.msra.mxu0 0
    %1477 = vmatprep.subr.bf16.mxu0 0
    %1478 = vmatpush1.bf16.msra.mxu0 0
    %1479 = vmatprep.subr.bf16.mxu0 0
    %1480 = vmatpush1.bf16.msra.mxu0 0
    %1481 = vmatprep.subr.bf16.mxu0 0
    %1482 = vmatpush1.bf16.msra.mxu0 0
    %1483 = vmatprep.subr.bf16.mxu0 0
    %1484 = vmatpush1.bf16.msra.mxu0 0
    %1485 = vmatprep.mubr.bf16.mxu0 0
    %1486 = vmatmul.mubr.bf16.gmra.mrb[0].mxu0 %v1451
    %v1487 = vpop.f32.mrb[0].mxu0
    %v1488 = vadd.f32 0.0, %v1487
    %v1489 = vpop.f32.mrb[0].mxu0
    %v1490 = vpop.f32.mrb[0].mxu0
    %v1491 = vpop.f32.mrb[0].mxu0
    %1492 = vdwg.mxu0
    %v1493 = vadd.f32 %v1447, %v1488
    %v1494 = vxor.u32 %v1446, 2147483648
    %v1495 = vmul.f32 %v1494, 1.442695
    %v1496 = vpow.pop %v1495
    %v1497 = vadd.f32 %v1496, 1.0
    %v1498 = vrcp.pop %v1497
    %v1499 = vmul.f32 1.0, %v1498
    %v1500 = vtanh.pop %v1446
    %v1501 = vmul.f32 %v1499, %v1327
    %1503 = vrot.lane.b32.xlu0 %v1500, 32
    %v1504 = vpop.permute.xlu0 %1503
    %v1506 = vmul.f32 %v1499, %v1504
    %1508 = vrot.lane.b32.xlu0 %v1506, 32
    %v1509 = vpop.permute.xlu0 %1508
    %v1511 = vadd.f32 %v1501, %v1509
    %v1512 = vtanh.pop %v1511
    %1514 = vrot.lane.b32.xlu0 %v1512, 32
    %v1515 = vpop.permute.xlu0 %1514
    %v1517 = vmul.f32 %v1499, %v1515
    %v1518 = vxor.u32 %v1493, 2147483648
    %v1519 = vmul.f32 %v1518, 1.442695
    %v1520 = vpow.pop %v1519
    %v1521 = vadd.f32 %v1520, 1.0
    %v1522 = vrcp.pop %v1521
    %v1523 = vmul.f32 1.0, %v1522
    %v1524 = vtanh.pop %v1493
    %v1525 = vmul.f32 %v1523, %v1351
    %1527 = vrot.lane.b32.xlu0 %v1524, 32
    %v1528 = vpop.permute.xlu0 %1527
    %v1530 = vmul.f32 %v1523, %v1528
    %1532 = vrot.lane.b32.xlu0 %v1530, 32
    %v1533 = vpop.permute.xlu0 %1532
    %v1535 = vadd.f32 %v1525, %v1533
    %v1536 = vtanh.pop %v1535
    %1538 = vrot.lane.b32.xlu0 %v1536, 32
    %v1539 = vpop.permute.xlu0 %1538
    %v1541 = vmul.f32 %v1523, %v1539
    %v1542 = vpack.c.bf16 %v1517, %v1517
    %v1545 = vunpack.c.l.s4 1966171168
    %v1546 = vunpack.c.0.s8 %v1545
    %v1547 = vlaneseq
    %v1548 = vshrl.u32 %v1547, 7
    %v1549 = vsub.s32 %v1546, %v1548
    %v1550 = vrot.slane %v1542, %v1549
    %v1552 = vunpack.c.l.s4 1966171168
    %v1553 = vunpack.c.0.s8 %v1552
    %v1554 = vlaneseq
    %v1555 = vshrl.u32 %v1554, 7
    %v1556 = vsub.s32 %v1553, %v1555
    %v1557 = vrot.slane %v1550, %v1556
    %1558 = vrot.lane.b32.xlu0 %v1557, 64
    %v1559 = vpop.permute.xlu0 %1558
    %s1561 = scalar_lea.vmem [#allocation14], 6
    %1562 = vst.msk [vmem:[%s1561] sm:$0x1] %vm457, %v1559
    %v1563 = vpack.c.bf16 %v1541, %v1541
    %v1566 = vunpack.c.l.s4 1966171168
    %v1567 = vunpack.c.0.s8 %v1566
    %v1568 = vlaneseq
    %v1569 = vshrl.u32 %v1568, 7
    %v1570 = vsub.s32 %v1567, %v1569
    %v1571 = vrot.slane %v1563, %v1570
    %v1573 = vunpack.c.l.s4 1966171168
    %v1574 = vunpack.c.0.s8 %v1573
    %v1575 = vlaneseq
    %v1576 = vshrl.u32 %v1575, 7
    %v1577 = vsub.s32 %v1574, %v1576
    %v1578 = vrot.slane %v1571, %v1577
    %1579 = vrot.lane.b32.xlu0 %v1578, 64
    %v1580 = vpop.permute.xlu0 %1579
    %s1582 = scalar_lea.vmem [#allocation15], 1
    %1583 = vst.msk [vmem:[%s1582] sm:$0x1] %vm457, %v1580
    %v1584 = vld [vmem:[#allocation2 + $0xe] sm:$0x3]
    %1585 = vrot.lane.b32.xlu0 %v1542, 64
    %v1586 = vpop.permute.xlu0 %1585
    %v1588 = vsel %vm144, %v1586, 0
    %1590 = vmatprep.subr.bf16.mxu0 0
    %1591 = vmatpush1.bf16.msra.mxu0 %v276
    %1592 = vmatprep.subr.bf16.mxu0 0
    %1593 = vmatpush1.bf16.msra.mxu0 %v277
    %1594 = vmatprep.subr.bf16.mxu0 0
    %1595 = vmatpush1.bf16.msra.mxu0 0
    %1596 = vmatprep.subr.bf16.mxu0 0
    %1597 = vmatpush1.bf16.msra.mxu0 0
    %1598 = vmatprep.subr.bf16.mxu0 0
    %1599 = vmatpush1.bf16.msra.mxu0 0
    %1600 = vmatprep.subr.bf16.mxu0 0
    %1601 = vmatpush1.bf16.msra.mxu0 0
    %1602 = vmatprep.subr.bf16.mxu0 0
    %1603 = vmatpush1.bf16.msra.mxu0 0
    %1604 = vmatprep.subr.bf16.mxu0 0
    %1605 = vmatpush1.bf16.msra.mxu0 0
    %1606 = vmatprep.subr.bf16.mxu0 0
    %1607 = vmatpush1.bf16.msra.mxu0 0
    %1608 = vmatprep.subr.bf16.mxu0 0
    %1609 = vmatpush1.bf16.msra.mxu0 0
    %1610 = vmatprep.subr.bf16.mxu0 0
    %1611 = vmatpush1.bf16.msra.mxu0 0
    %1612 = vmatprep.subr.bf16.mxu0 0
    %1613 = vmatpush1.bf16.msra.mxu0 0
    %1614 = vmatprep.subr.bf16.mxu0 0
    %1615 = vmatpush1.bf16.msra.mxu0 0
    %1616 = vmatprep.subr.bf16.mxu0 0
    %1617 = vmatpush1.bf16.msra.mxu0 0
    %1618 = vmatprep.subr.bf16.mxu0 0
    %1619 = vmatpush1.bf16.msra.mxu0 0
    %1620 = vmatprep.subr.bf16.mxu0 0
    %1621 = vmatpush1.bf16.msra.mxu0 0
    %1622 = vmatprep.mubr.bf16.mxu0 0
    %1623 = vmatmul.mubr.bf16.gmra.mrb[0].mxu0 %v1588
    %v1624 = vpop.f32.mrb[0].mxu0
    %v1625 = vadd.f32 0.0, %v1624
    %v1626 = vpop.f32.mrb[0].mxu0
    %v1627 = vpop.f32.mrb[0].mxu0
    %v1628 = vpop.f32.mrb[0].mxu0
    %1629 = vdwg.mxu0
    %v1630 = vadd.f32 %v1584, %v1625
    %v1631 = vld [vmem:[#allocation3] sm:$0x3]
    %1632 = vrot.lane.b32.xlu0 %v1563, 64
    %v1633 = vpop.permute.xlu0 %1632
    %v1635 = vsel %vm144, %v1633, 0
    %1637 = vmatprep.subr.bf16.mxu0 0
    %1638 = vmatpush1.bf16.msra.mxu0 %v334
    %1639 = vmatprep.subr.bf16.mxu0 0
    %1640 = vmatpush1.bf16.msra.mxu0 %v335
    %1641 = vmatprep.subr.bf16.mxu0 0
    %1642 = vmatpush1.bf16.msra.mxu0 0
    %1643 = vmatprep.subr.bf16.mxu0 0
    %1644 = vmatpush1.bf16.msra.mxu0 0
    %1645 = vmatprep.subr.bf16.mxu0 0
    %1646 = vmatpush1.bf16.msra.mxu0 0
    %1647 = vmatprep.subr.bf16.mxu0 0
    %1648 = vmatpush1.bf16.msra.mxu0 0
    %1649 = vmatprep.subr.bf16.mxu0 0
    %1650 = vmatpush1.bf16.msra.mxu0 0
    %1651 = vmatprep.subr.bf16.mxu0 0
    %1652 = vmatpush1.bf16.msra.mxu0 0
    %1653 = vmatprep.subr.bf16.mxu0 0
    %1654 = vmatpush1.bf16.msra.mxu0 0
    %1655 = vmatprep.subr.bf16.mxu0 0
    %1656 = vmatpush1.bf16.msra.mxu0 0
    %1657 = vmatprep.subr.bf16.mxu0 0
    %1658 = vmatpush1.bf16.msra.mxu0 0
    %1659 = vmatprep.subr.bf16.mxu0 0
    %1660 = vmatpush1.bf16.msra.mxu0 0
    %1661 = vmatprep.subr.bf16.mxu0 0
    %1662 = vmatpush1.bf16.msra.mxu0 0
    %1663 = vmatprep.subr.bf16.mxu0 0
    %1664 = vmatpush1.bf16.msra.mxu0 0
    %1665 = vmatprep.subr.bf16.mxu0 0
    %1666 = vmatpush1.bf16.msra.mxu0 0
    %1667 = vmatprep.subr.bf16.mxu0 0
    %1668 = vmatpush1.bf16.msra.mxu0 0
    %1669 = vmatprep.mubr.bf16.mxu0 0
    %1670 = vmatmul.mubr.bf16.gmra.mrb[0].mxu0 %v1635
    %v1671 = vpop.f32.mrb[0].mxu0
    %v1672 = vadd.f32 0.0, %v1671
    %v1673 = vpop.f32.mrb[0].mxu0
    %v1674 = vpop.f32.mrb[0].mxu0
    %v1675 = vpop.f32.mrb[0].mxu0
    %1676 = vdwg.mxu0
    %v1677 = vadd.f32 %v1631, %v1672
    %v1678 = vxor.u32 %v1630, 2147483648
    %v1679 = vmul.f32 %v1678, 1.442695
    %v1680 = vpow.pop %v1679
    %v1681 = vadd.f32 %v1680, 1.0
    %v1682 = vrcp.pop %v1681
    %v1683 = vmul.f32 1.0, %v1682
    %v1684 = vtanh.pop %v1630
    %v1685 = vmul.f32 %v1683, %v1511
    %1687 = vrot.lane.b32.xlu0 %v1684, 32
    %v1688 = vpop.permute.xlu0 %1687
    %v1690 = vmul.f32 %v1683, %v1688
    %1692 = vrot.lane.b32.xlu0 %v1690, 32
    %v1693 = vpop.permute.xlu0 %1692
    %v1695 = vadd.f32 %v1685, %v1693
    %v1696 = vtanh.pop %v1695
    %1698 = vrot.lane.b32.xlu0 %v1696, 32
    %v1699 = vpop.permute.xlu0 %1698
    %v1701 = vmul.f32 %v1683, %v1699
    %v1702 = vxor.u32 %v1677, 2147483648
    %v1703 = vmul.f32 %v1702, 1.442695
    %v1704 = vpow.pop %v1703
    %v1705 = vadd.f32 %v1704, 1.0
    %v1706 = vrcp.pop %v1705
    %v1707 = vmul.f32 1.0, %v1706
    %v1708 = vtanh.pop %v1677
    %v1709 = vmul.f32 %v1707, %v1535
    %1711 = vrot.lane.b32.xlu0 %v1708, 32
    %v1712 = vpop.permute.xlu0 %1711
    %v1714 = vmul.f32 %v1707, %v1712
    %1716 = vrot.lane.b32.xlu0 %v1714, 32
    %v1717 = vpop.permute.xlu0 %1716
    %v1719 = vadd.f32 %v1709, %v1717
    %v1720 = vtanh.pop %v1719
    %1722 = vrot.lane.b32.xlu0 %v1720, 32
    %v1723 = vpop.permute.xlu0 %1722
    %v1725 = vmul.f32 %v1707, %v1723
    %v1726 = vpack.c.bf16 %v1701, %v1701
    %v1729 = vunpack.c.l.s4 1966171168
    %v1730 = vunpack.c.0.s8 %v1729
    %v1731 = vlaneseq
    %v1732 = vshrl.u32 %v1731, 7
    %v1733 = vsub.s32 %v1730, %v1732
    %v1734 = vrot.slane %v1726, %v1733
    %v1736 = vunpack.c.l.s4 1966171168
    %v1737 = vunpack.c.0.s8 %v1736
    %v1738 = vlaneseq
    %v1739 = vshrl.u32 %v1738, 7
    %v1740 = vsub.s32 %v1737, %v1739
    %v1741 = vrot.slane %v1734, %v1740
    %1742 = vrot.lane.b32.xlu0 %v1741, 64
    %v1743 = vpop.permute.xlu0 %1742
    %s1745 = scalar_lea.vmem [#allocation14], 7
    %1746 = vst.msk [vmem:[%s1745] sm:$0x1] %vm457, %v1743
    %v1747 = vpack.c.bf16 %v1725, %v1725
    %v1750 = vunpack.c.l.s4 1966171168
    %v1751 = vunpack.c.0.s8 %v1750
    %v1752 = vlaneseq
    %v1753 = vshrl.u32 %v1752, 7
    %v1754 = vsub.s32 %v1751, %v1753
    %v1755 = vrot.slane %v1747, %v1754
    %v1757 = vunpack.c.l.s4 1966171168
    %v1758 = vunpack.c.0.s8 %v1757
    %v1759 = vlaneseq
    %v1760 = vshrl.u32 %v1759, 7
    %v1761 = vsub.s32 %v1758, %v1760
    %v1762 = vrot.slane %v1755, %v1761
    %1763 = vrot.lane.b32.xlu0 %v1762, 64
    %v1764 = vpop.permute.xlu0 %1763
    %1766 = vst.msk [vmem:[#allocation15] sm:$0x1] %vm457, %v1764
    %1768 = vrot.lane.b32.xlu0 %v1701, 64
    %v1769 = vpop.permute.xlu0 %1768
    %vm1771 = vcmask 254976
    %1772 = vst.msk [vmem:[#allocation4] sm:$0x3] %vm1771, %v1769
    %1774 = vrot.lane.b32.xlu0 %v1695, 96
    %v1775 = vpop.permute.xlu0 %1774
    %1777 = vst.msk [vmem:[#allocation5] sm:$0x3] %vm1771, %v1775
    %1779 = vrot.lane.b32.xlu0 %v1725, 64
    %v1780 = vpop.permute.xlu0 %1779
    %1782 = vst.msk [vmem:[%s262] sm:$0x3] %vm1771, %v1780
    %1784 = vrot.lane.b32.xlu0 %v1719, 96
    %v1785 = vpop.permute.xlu0 %1784
    %1787 = vst.msk [vmem:[%s264] sm:$0x3] %vm1771, %v1785
    // Predicated region
    $region42: #{tpu_custom_call.1} parent=1 // pred_check
      _
    $region43: #{tpu_custom_call.1} parent=1 // pred_check_branch
      %1789 = sbr.rel (0) target = $region45
    $region44: #{tpu_custom_call.1} parent=1 // pred_region
      %s1791 = ssub.s32 128, 128
      %1792 = vsyncadd [#allocation8], %s1791
      %s1793 = sshll.u32 [#allocation14], 4
      %s1794 = int_to_ptr.vmem [resolvable:$true] %s1793
      %1799 = dma.vmem_to_hbm [thread:$0]  %s1794, 128, %s5, [#allocation8], 16, 16, 1
    $region45: #{tpu_custom_call.1} parent=1 // pred_fallthru
      _
    // Predicated region
    $region46: #{tpu_custom_call.1} parent=1 // pred_check
      _
    $region47: #{tpu_custom_call.1} parent=1 // pred_check_branch
      %1801 = sbr.rel (0) target = $region49
    $region48: #{tpu_custom_call.1} parent=1 // pred_region
      %s1802 = ssub.s32 0, 0
      %s1803 = smul.u32 8, %s1802
      %s1805 = ssub.s32 128, 128
      %1806 = vsyncadd [#allocation16], %s1805
      %s1807 = smul.addr %s1803, 16
      %s1808 = scalar_lea.hbm %s6, %s1807
      %s1809 = sshll.u32 [#allocation15], 4
      %s1810 = int_to_ptr.vmem [resolvable:$true] %s1809
      %1815 = dma.vmem_to_hbm [thread:$0]  %s1810, 128, %s1808, [#allocation16], 16, 16, 1
    $region49: #{tpu_custom_call.1} parent=1 // pred_fallthru
      _
    // Predicated region
    $region50: #{tpu_custom_call.1} parent=1 // pred_check
      _
    $region51: #{tpu_custom_call.1} parent=1 // pred_check_branch
      %1817 = sbr.rel (0) target = $region53
    $region52: #{tpu_custom_call.1} parent=1 // pred_region
      %1818 = dma.done [#allocation8], 128
    $region53: #{tpu_custom_call.1} parent=1 // pred_fallthru
      _
    // Predicated region
    $region54: #{tpu_custom_call.1} parent=1 // pred_check
      _
    $region55: #{tpu_custom_call.1} parent=1 // pred_check_branch
      %1820 = sbr.rel (0) target = $region57
    $region56: #{tpu_custom_call.1} parent=1 // pred_region
      %1821 = dma.done [#allocation16], 128
    $region57: #{tpu_custom_call.1} parent=1 // pred_fallthru
      _
    %1822 = vsyncpa [#allocation7], 1
    %1823 = vsyncpa [#allocation10], 1
    %1824 = vsyncpa [#allocation13], 1
    %1825 = vsyncpa [#allocation8], 1
    %1826 = vsyncpa [#allocation16], 1

</llo_original>
